<compile_context>
chip_gen: v5e
topology: v5e:2x2
jax: 0.10.0
libtpu: 0.0.40
codegen_flags: <defaults>
</compile_context>

<pallas_src>
import functools

import numpy as np
import jax
import jax.numpy as jnp
from jax.experimental import pallas as pl
from jax.experimental.pallas import tpu as pltpu


# ---------------------------------------------------------------------------
# Fully fused kernel (one grid step == one image)
# ---------------------------------------------------------------------------
def _fused_block_kernel(x_ref, colid_ref, w1_ref, b1_ref, w2_ref, b2_ref,
                        g_ref, beta_ref, o_ref,
                        xpad_ref, colsA_ref, tpad_ref, colsB_ref,
                        *, H, W, Cin, C, r, slope, dtype):
    HW = H * W
    mid = C * r * r
    off = W + 1                      # start of real data in row-padded buffers

    col = colid_ref[...]             # (1, HW) int32: w coordinate of each pixel
    m_left = col >= 1                # column shift -1 stays inside the row
    m_right = col <= (W - 2)         # column shift +1 stays inside the row

    # ---- stage 1: halo in VMEM (no HBM-side jnp.pad) -----------------------
    xpad_ref[...] = jnp.zeros_like(xpad_ref)
    xpad_ref[:, off:off + HW] = x_ref[0]

    # ---- stage 2: one im2col matmul for BOTH convs that read x -------------
    # subpel_conv and subpel share the input; their weights are concatenated
    # along the output-channel dim so a single MXU call computes both branches.
    for dy in range(3):
        for dx in range(3):
            k = dy * 3 + dx
            s = dy * W + dx                                  # lane offset of this tap
            piece = xpad_ref[:, s:s + HW]                    # (Cin, HW)
            if dx == 0:
                piece = jnp.where(m_left, piece, 0.0)
            elif dx == 2:
                piece = jnp.where(m_right, piece, 0.0)
            colsA_ref[k * Cin:(k + 1) * Cin, :] = piece
    z1 = jnp.dot(w1_ref[...], colsA_ref[...],
                 preferred_element_type=jnp.float32) + b1_ref[...]   # (2*mid, HW)

    # ---- stage 3: LeakyReLU on the subpel_conv branch; stash both branches -
    # Output rows are already phase-major (see weight prep), so PixelShuffle is
    # just "which row block do I read later", never a data shuffle.
    tpad_ref[...] = jnp.zeros_like(tpad_ref)
    t_half = z1[:mid, :]
    t_half = jnp.where(t_half >= 0, t_half, slope * t_half)
    tpad_ref[0:mid, off:off + HW] = t_half.astype(dtype)
    tpad_ref[mid:2 * mid, off:off + HW] = z1[mid:, :].astype(dtype)

    # ---- stage 4: 3x3 conv over the (virtually) upsampled map + iGDN + add -
    # One output phase (a, b) of the upsampled grid at a time; each 3x3 tap
    # maps to (source phase, low-res shift)  (sub-pixel-conv identity), so all
    # work stays on the lane-dense low-res grid.
    for a in range(r):
        for b in range(r):
            for dy in range(3):
                qr, vr = divmod(a + dy - 1, r)   # low-res row shift, src row phase
                for dx in range(3):
                    qc, vc = divmod(b + dx - 1, r)
                    k = dy * 3 + dx
                    src = (vr * r + vc) * C
                    s = (qr + 1) * W + (qc + 1)
                    piece = tpad_ref[src:src + C, s:s + HW]          # (C, HW)
                    if qc == -1:
                        piece = jnp.where(m_left, piece, 0.0)
                    elif qc == 1:
                        piece = jnp.where(m_right, piece, 0.0)
                    colsB_ref[k * C:(k + 1) * C, :] = piece
            z2 = jnp.dot(w2_ref[...], colsB_ref[...],
                         preferred_element_type=jnp.float32) + b2_ref[...]   # (C, HW)
            # inverse GDN: out = z * sqrt(gamma @ z^2 + beta)  (clamp guards sqrt)
            norm = jnp.dot(g_ref[...], z2 * z2,
                           preferred_element_type=jnp.float32) + beta_ref[...]
            norm = jnp.maximum(norm, 0.0)
            p = a * r + b
            ident = tpad_ref[mid + p * C: mid + (p + 1) * C, off:off + HW]
            o_ref[0, a, b] = z2 * jnp.sqrt(norm) + ident.astype(jnp.float32)


# ---------------------------------------------------------------------------
# One-time weight preparation (static index_channel slicing hoisted here)
# ---------------------------------------------------------------------------
def prepare_slide(params, index_channel=0, dtype=jnp.float32):
    """Slice the slide, permute conv1 outputs to phase-major order and reshape
    all weights to im2col form.  Call once; reuse for every forward."""
    r = params["upsample"]
    i = index_channel
    in_s, in_e = params["in_ch_start"][i], params["in_ch_end"][i]
    out_s, out_e = params["out_ch_start"][i], params["out_ch_end"][i]
    Cin, C = in_e - in_s, out_e - out_s
    mid = C * r * r
    mid_s, mid_e = out_s * r * r, out_e * r * r

    def to_mat(w_oihw):                      # OIHW (O,I,3,3) -> (O, 9*I), cols (dy,dx,i)
        O, I, KH, KW = w_oihw.shape
        return jnp.transpose(w_oihw, (0, 2, 3, 1)).reshape(O, KH * KW * I)

    # phase-major permutation of the mid channels: new row j = p*C + c comes
    # from original channel c*r*r + p  (p = a*r + b is the PixelShuffle phase).
    perm = np.asarray([c * r * r + p for p in range(r * r) for c in range(C)])

    w1t = to_mat(params["w_subpel_conv"][mid_s:mid_e, in_s:in_e])[perm]
    b1t = params["b_subpel_conv"][mid_s:mid_e][perm]
    w1i = to_mat(params["w_subpel"][mid_s:mid_e, in_s:in_e])[perm]
    b1i = params["b_subpel"][mid_s:mid_e][perm]
    W1 = jnp.concatenate([w1t, w1i], axis=0).astype(dtype)            # (2*mid, 9*Cin)
    b1 = jnp.concatenate([b1t, b1i], axis=0).reshape(2 * mid, 1).astype(jnp.float32)

    W2 = to_mat(params["w_conv"][out_s:out_e, out_s:out_e]).astype(dtype)   # (C, 9*C)
    b2 = params["b_conv"][out_s:out_e].reshape(C, 1).astype(jnp.float32)

    gamma = params["gdn_gamma"][i].astype(jnp.float32)                # (C, C)
    beta = params["gdn_beta"][i].reshape(C, 1).astype(jnp.float32)

    return dict(r=r, Cin=Cin, C=C, W1=W1, b1=b1, W2=W2, b2=b2,
                gamma=gamma, beta=beta, dtype=dtype)


# ---------------------------------------------------------------------------
# Forward pass (NCHW in / NCHW out, like the PyTorch module)
# ---------------------------------------------------------------------------
def residual_block_upsample_slide(x_nchw, prepped):
    N, Cin, H, W = x_nchw.shape
    r, C, dtype = prepped["r"], prepped["C"], prepped["dtype"]
    assert Cin == prepped["Cin"], (Cin, prepped["Cin"])
    HW = H * W
    mid = C * r * r

    x_flat = x_nchw.reshape(N, Cin, HW).astype(dtype)          # free reshape (NCHW kept)
    col_ids = (jnp.arange(HW, dtype=jnp.int32) % W).reshape(1, HW)

    kern = functools.partial(_fused_block_kernel, H=H, W=W, Cin=Cin, C=C, r=r,
                             slope=0.01, dtype=dtype)
    const = lambda n: (0, 0)

    out5 = pl.pallas_call(
        kern,
        out_shape=jax.ShapeDtypeStruct((N, r, r, C, HW), jnp.float32),
        grid_spec=pltpu.PrefetchScalarGridSpec(
            num_scalar_prefetch=0,
            grid=(N,),
            in_specs=[
                pl.BlockSpec((1, Cin, HW), lambda n: (n, 0, 0)),   # x (NCHW, flat pixels)
                pl.BlockSpec((1, HW), const),                      # pixel column ids
                pl.BlockSpec((2 * mid, 9 * Cin), const),           # fused conv1 weights
                pl.BlockSpec((2 * mid, 1), const),                 # fused conv1 bias
                pl.BlockSpec((C, 9 * C), const),                   # conv2 weights
                pl.BlockSpec((C, 1), const),                       # conv2 bias
                pl.BlockSpec((C, C), const),                       # GDN gamma
                pl.BlockSpec((C, 1), const),                       # GDN beta
            ],
            out_specs=pl.BlockSpec((1, r, r, C, HW), lambda n: (n, 0, 0, 0, 0)),
            scratch_shapes=[
                pltpu.VMEM((Cin, (H + 2) * W + 2), dtype),         # row-padded x
                pltpu.VMEM((9 * Cin, HW), dtype),                  # im2col for conv1
                pltpu.VMEM((2 * mid, (H + 2) * W + 2), dtype),     # row-padded t | identity
                pltpu.VMEM((9 * C, HW), dtype),                    # im2col for conv2
            ]),
        compiler_params=pltpu.CompilerParams(
            dimension_semantics=("parallel",)),
    )(x_flat, col_ids, prepped["W1"], prepped["b1"], prepped["W2"],
      prepped["b2"], prepped["gamma"], prepped["beta"])

    # (N, r, r, C, H*W) -> NCHW (N, C, H*r, W*r): one XLA transpose of the final
    # (smallest) tensor; the reshapes around it are layout-only.
    out = out5.reshape(N, r, r, C, H, W)
    out = jnp.transpose(out, (0, 3, 4, 1, 5, 2))
    return out.reshape(N, C, H * r, W * r)


# ---------------------------------------------------------------------------
# Deterministic synthetic parameters (PyTorch OIHW layout, shapes match module)
# ---------------------------------------------------------------------------
def init_params(key, in_ch, out_ch, in_ch_start, in_ch_end,
                out_ch_start, out_ch_end, upsample=2):
    r = upsample
    mid = out_ch * r * r
    k1, k2, k3 = jax.random.split(key, 3)
    scale = 0.1
    # GDN params are the *reparametrized* (non-negative) values; at init
    # gamma = 0.1*I, beta = 1 like compressai's GDN.  Real checkpoints must be
    # passed through the NonNegativeParametrizer before loading here.
    gdn_gamma, gdn_beta = [], []
    for s, e in zip(out_ch_start, out_ch_end):
        n = e - s
        gdn_gamma.append(0.1 * jnp.eye(n, dtype=jnp.float32))
        gdn_beta.append(jnp.ones((n,), jnp.float32))
    return dict(
        upsample=r,
        in_ch_start=list(in_ch_start), in_ch_end=list(in_ch_end),
        out_ch_start=list(out_ch_start), out_ch_end=list(out_ch_end),
        # PyTorch Conv2d layout: OIHW.
        w_subpel_conv=scale * jax.random.normal(k1, (mid, in_ch, 3, 3), jnp.float32),
        b_subpel_conv=jnp.full((mid,), 0.01, jnp.float32),
        w_conv=scale * jax.random.normal(k2, (out_ch, out_ch, 3, 3), jnp.float32),
        b_conv=jnp.full((out_ch,), 0.01, jnp.float32),
        w_subpel=scale * jax.random.normal(k3, (mid, in_ch, 3, 3), jnp.float32),
        b_subpel=jnp.full((mid,), 0.01, jnp.float32),
        gdn_gamma=gdn_gamma, gdn_beta=gdn_beta,
    )


# ---------------------------------------------------------------------------
# Pure-JAX (XLA) reference of the PyTorch module, used for a correctness check
# ---------------------------------------------------------------------------
def reference_forward(x, params, index_channel=0):
    r = params["upsample"]
    i = index_channel
    in_s, in_e = params["in_ch_start"][i], params["in_ch_end"][i]
    out_s, out_e = params["out_ch_start"][i], params["out_ch_end"][i]
    mid_s, mid_e = out_s * r * r, out_e * r * r
    hp = jax.lax.Precision.HIGHEST

    def conv3(x, w, b):
        y = jax.lax.conv_general_dilated(
            x, w, window_strides=(1, 1), padding=((1, 1), (1, 1)),
            dimension_numbers=("NCHW", "OIHW", "NCHW"), precision=hp)
        return y + b.reshape(1, -1, 1, 1)

    def shuffle(x, r):
        N, Crr, H, W = x.shape
        C = Crr // (r * r)
        x = x.reshape(N, C, r, r, H, W)
        return jnp.transpose(x, (0, 1, 4, 2, 5, 3)).reshape(N, C, H * r, W * r)

    w1 = params["w_subpel_conv"][mid_s:mid_e, in_s:in_e]
    b1 = params["b_subpel_conv"][mid_s:mid_e]
    w2 = params["w_conv"][out_s:out_e, out_s:out_e]
    b2 = params["b_conv"][out_s:out_e]
    w3 = params["w_subpel"][mid_s:mid_e, in_s:in_e]
    b3 = params["b_subpel"][mid_s:mid_e]
    gamma, beta = params["gdn_gamma"][i], params["gdn_beta"][i]

    t = shuffle(conv3(x, w1, b1), r)
    t = jnp.where(t >= 0, t, 0.01 * t)
    t = conv3(t, w2, b2)
    norm = jnp.einsum("oi,nihw->nohw", gamma, t * t, precision=hp) + beta.reshape(1, -1, 1, 1)
    t = t * jnp.sqrt(norm)
    ident = shuffle(conv3(x, w3, b3), r)
    return t + ident


if __name__ == "__main__":
    key = jax.random.PRNGKey(0)
    kx, kp = jax.random.split(key)

    in_ch, out_ch, upsample = 4, 4, 2
    in_ch_start, in_ch_end = [0], [in_ch]
    out_ch_start, out_ch_end = [0], [out_ch]

    x = jax.random.normal(kx, (2, in_ch, 16, 16), jnp.float32)    # NCHW like PyTorch
    params = init_params(kp, in_ch, out_ch, in_ch_start, in_ch_end,
                         out_ch_start, out_ch_end, upsample=upsample)

    prepped = prepare_slide(params, index_channel=0)              # hoisted, runs once
    fwd = jax.jit(lambda v: residual_block_upsample_slide(v, prepped))

    y = jax.block_until_ready(fwd(x))
    assert y.shape == (2, out_ch, 32, 32), y.shape
    assert bool(jnp.all(jnp.isfinite(y)))

    # numerical check against the pure-JAX reference of the PyTorch module
    y_ref = reference_forward(x, params, index_channel=0)
    max_err = float(jnp.max(jnp.abs(y - y_ref)))
    assert max_err < 1e-2, f"mismatch vs reference: max abs err = {max_err}"

    print("KERNEL_OK")
</pallas_src>

<mosaic_0001>
module attributes {stable_mosaic.version = 11 : i64} {
  func.func @_fused_block_kernel(%arg0: i32, %arg1: memref<1x4x256xf32, #tpu.memory_space<vmem>>, %arg2: memref<1x256xi32, #tpu.memory_space<vmem>>, %arg3: memref<32x36xf32, #tpu.memory_space<vmem>>, %arg4: memref<32x1xf32, #tpu.memory_space<vmem>>, %arg5: memref<4x36xf32, #tpu.memory_space<vmem>>, %arg6: memref<4x1xf32, #tpu.memory_space<vmem>>, %arg7: memref<4x4xf32, #tpu.memory_space<vmem>>, %arg8: memref<4x1xf32, #tpu.memory_space<vmem>>, %arg9: memref<1x2x2x4x256xf32, #tpu.memory_space<vmem>>, %arg10: memref<4x290xf32, #tpu.memory_space<vmem>>, %arg11: memref<36x256xf32, #tpu.memory_space<vmem>>, %arg12: memref<32x290xf32, #tpu.memory_space<vmem>>, %arg13: memref<36x256xf32, #tpu.memory_space<vmem>>) attributes {dimension_semantics = [#tpu.dimension_semantics<parallel>], iteration_bounds = array<i64: 2>, scalar_prefetch = 0 : i64, scratch_operands = 4 : i64, tpu.core_type = #tpu.core_type<tc>, window_params = [{transform_indices = @transform_0, window_bounds = array<i64: 1, 4, 256>}, {pipeline_mode = #tpu.pipeline_mode<synchronous>, transform_indices = @transform_1, window_bounds = array<i64: 1, 256>}, {pipeline_mode = #tpu.pipeline_mode<synchronous>, transform_indices = @transform_2, window_bounds = array<i64: 32, 36>}, {pipeline_mode = #tpu.pipeline_mode<synchronous>, transform_indices = @transform_3, window_bounds = array<i64: 32, 1>}, {pipeline_mode = #tpu.pipeline_mode<synchronous>, transform_indices = @transform_4, window_bounds = array<i64: 4, 36>}, {pipeline_mode = #tpu.pipeline_mode<synchronous>, transform_indices = @transform_5, window_bounds = array<i64: 4, 1>}, {pipeline_mode = #tpu.pipeline_mode<synchronous>, transform_indices = @transform_6, window_bounds = array<i64: 4, 4>}, {pipeline_mode = #tpu.pipeline_mode<synchronous>, transform_indices = @transform_7, window_bounds = array<i64: 4, 1>}, {transform_indices = @transform_8, window_bounds = array<i64: 1, 2, 2, 4, 256>}]} {
    %c0 = arith.constant 0 : index
    %c0_0 = arith.constant 0 : index
    %0 = vector.load %arg2[%c0, %c0_0] : memref<1x256xi32, #tpu.memory_space<vmem>>, vector<1x256xi32>
    %c1_i32 = arith.constant 1 : i32
    %1 = vector.broadcast %c1_i32 : i32 to vector<1x256xi32>
    %2 = arith.cmpi sge, %0, %1 : vector<1x256xi32>
    %c14_i32 = arith.constant 14 : i32
    %3 = vector.broadcast %c14_i32 : i32 to vector<1x256xi32>
    %4 = arith.cmpi sle, %0, %3 : vector<1x256xi32>
    %cst = arith.constant 0.000000e+00 : f32
    %5 = vector.broadcast %cst : f32 to vector<4x290xf32>
    %c0_1 = arith.constant 0 : index
    %c0_2 = arith.constant 0 : index
    %6 = vector.load %arg10[%c0_1, %c0_2] : memref<4x290xf32, #tpu.memory_space<vmem>>, vector<4x290xf32>
    tpu.vector_store %arg10[%c0_1, %c0_2], %5 {strides = array<i32>} : memref<4x290xf32, #tpu.memory_space<vmem>>, vector<4x290xf32>,
    %c0_3 = arith.constant 0 : index
    %c0_4 = arith.constant 0 : index
    %c0_5 = arith.constant 0 : index
    %7 = vector.load %arg1[%c0_3, %c0_4, %c0_5] : memref<1x4x256xf32, #tpu.memory_space<vmem>>, vector<1x4x256xf32>
    %8 = vector.shape_cast %7 : vector<1x4x256xf32> to vector<4x256xf32>
    %c0_6 = arith.constant 0 : index
    %c17 = arith.constant 17 : index
    %9 = vector.load %arg10[%c0_6, %c17] : memref<4x290xf32, #tpu.memory_space<vmem>>, vector<4x256xf32>
    tpu.vector_store %arg10[%c0_6, %c17], %8 {strides = array<i32>} : memref<4x290xf32, #tpu.memory_space<vmem>>, vector<4x256xf32>,
    %c0_7 = arith.constant 0 : index
    %c0_8 = arith.constant 0 : index
    %10 = vector.load %arg10[%c0_7, %c0_8] : memref<4x290xf32, #tpu.memory_space<vmem>>, vector<4x256xf32>
    %cst_9 = arith.constant 0.000000e+00 : f32
    %11 = vector.shape_cast %2 : vector<1x256xi1> to vector<1x256xi1>
    %12 = vector.broadcast %11 : vector<1x256xi1> to vector<4x256xi1>
    %13 = vector.broadcast %cst_9 : f32 to vector<4x256xf32>
    %14 = arith.select %12, %10, %13 : vector<4x256xi1>, vector<4x256xf32>
    %c0_10 = arith.constant 0 : index
    %c0_11 = arith.constant 0 : index
    %15 = vector.load %arg11[%c0_10, %c0_11] : memref<36x256xf32, #tpu.memory_space<vmem>>, vector<4x256xf32>
    tpu.vector_store %arg11[%c0_10, %c0_11], %14 {strides = array<i32>} : memref<36x256xf32, #tpu.memory_space<vmem>>, vector<4x256xf32>,
    %c0_12 = arith.constant 0 : index
    %c1 = arith.constant 1 : index
    %16 = vector.load %arg10[%c0_12, %c1] : memref<4x290xf32, #tpu.memory_space<vmem>>, vector<4x256xf32>
    %c4 = arith.constant 4 : index
    %c0_13 = arith.constant 0 : index
    %17 = vector.load %arg11[%c4, %c0_13] : memref<36x256xf32, #tpu.memory_space<vmem>>, vector<4x256xf32>
    tpu.vector_store %arg11[%c4, %c0_13], %16 {strides = array<i32>} : memref<36x256xf32, #tpu.memory_space<vmem>>, vector<4x256xf32>,
    %c0_14 = arith.constant 0 : index
    %c2 = arith.constant 2 : index
    %18 = vector.load %arg10[%c0_14, %c2] : memref<4x290xf32, #tpu.memory_space<vmem>>, vector<4x256xf32>
    %cst_15 = arith.constant 0.000000e+00 : f32
    %19 = vector.shape_cast %4 : vector<1x256xi1> to vector<1x256xi1>
    %20 = vector.broadcast %19 : vector<1x256xi1> to vector<4x256xi1>
    %21 = vector.broadcast %cst_15 : f32 to vector<4x256xf32>
    %22 = arith.select %20, %18, %21 : vector<4x256xi1>, vector<4x256xf32>
    %c8 = arith.constant 8 : index
    %c0_16 = arith.constant 0 : index
    %23 = vector.load %arg11[%c8, %c0_16] : memref<36x256xf32, #tpu.memory_space<vmem>>, vector<4x256xf32>
    tpu.vector_store %arg11[%c8, %c0_16], %22 {strides = array<i32>} : memref<36x256xf32, #tpu.memory_space<vmem>>, vector<4x256xf32>,
    %c0_17 = arith.constant 0 : index
    %c16 = arith.constant 16 : index
    %24 = vector.load %arg10[%c0_17, %c16] : memref<4x290xf32, #tpu.memory_space<vmem>>, vector<4x256xf32>
    %cst_18 = arith.constant 0.000000e+00 : f32
    %25 = vector.shape_cast %2 : vector<1x256xi1> to vector<1x256xi1>
    %26 = vector.broadcast %25 : vector<1x256xi1> to vector<4x256xi1>
    %27 = vector.broadcast %cst_18 : f32 to vector<4x256xf32>
    %28 = arith.select %26, %24, %27 : vector<4x256xi1>, vector<4x256xf32>
    %c12 = arith.constant 12 : index
    %c0_19 = arith.constant 0 : index
    %29 = vector.load %arg11[%c12, %c0_19] : memref<36x256xf32, #tpu.memory_space<vmem>>, vector<4x256xf32>
    tpu.vector_store %arg11[%c12, %c0_19], %28 {strides = array<i32>} : memref<36x256xf32, #tpu.memory_space<vmem>>, vector<4x256xf32>,
    %c0_20 = arith.constant 0 : index
    %c17_21 = arith.constant 17 : index
    %30 = vector.load %arg10[%c0_20, %c17_21] : memref<4x290xf32, #tpu.memory_space<vmem>>, vector<4x256xf32>
    %c16_22 = arith.constant 16 : index
    %c0_23 = arith.constant 0 : index
    %31 = vector.load %arg11[%c16_22, %c0_23] : memref<36x256xf32, #tpu.memory_space<vmem>>, vector<4x256xf32>
    tpu.vector_store %arg11[%c16_22, %c0_23], %30 {strides = array<i32>} : memref<36x256xf32, #tpu.memory_space<vmem>>, vector<4x256xf32>,
    %c0_24 = arith.constant 0 : index
    %c18 = arith.constant 18 : index
    %32 = vector.load %arg10[%c0_24, %c18] : memref<4x290xf32, #tpu.memory_space<vmem>>, vector<4x256xf32>
    %cst_25 = arith.constant 0.000000e+00 : f32
    %33 = vector.shape_cast %4 : vector<1x256xi1> to vector<1x256xi1>
    %34 = vector.broadcast %33 : vector<1x256xi1> to vector<4x256xi1>
    %35 = vector.broadcast %cst_25 : f32 to vector<4x256xf32>
    %36 = arith.select %34, %32, %35 : vector<4x256xi1>, vector<4x256xf32>
    %c20 = arith.constant 20 : index
    %c0_26 = arith.constant 0 : index
    %37 = vector.load %arg11[%c20, %c0_26] : memref<36x256xf32, #tpu.memory_space<vmem>>, vector<4x256xf32>
    tpu.vector_store %arg11[%c20, %c0_26], %36 {strides = array<i32>} : memref<36x256xf32, #tpu.memory_space<vmem>>, vector<4x256xf32>,
    %c0_27 = arith.constant 0 : index
    %c32 = arith.constant 32 : index
    %38 = vector.load %arg10[%c0_27, %c32] : memref<4x290xf32, #tpu.memory_space<vmem>>, vector<4x256xf32>
    %cst_28 = arith.constant 0.000000e+00 : f32
    %39 = vector.shape_cast %2 : vector<1x256xi1> to vector<1x256xi1>
    %40 = vector.broadcast %39 : vector<1x256xi1> to vector<4x256xi1>
    %41 = vector.broadcast %cst_28 : f32 to vector<4x256xf32>
    %42 = arith.select %40, %38, %41 : vector<4x256xi1>, vector<4x256xf32>
    %c24 = arith.constant 24 : index
    %c0_29 = arith.constant 0 : index
    %43 = vector.load %arg11[%c24, %c0_29] : memref<36x256xf32, #tpu.memory_space<vmem>>, vector<4x256xf32>
    tpu.vector_store %arg11[%c24, %c0_29], %42 {strides = array<i32>} : memref<36x256xf32, #tpu.memory_space<vmem>>, vector<4x256xf32>,
    %c0_30 = arith.constant 0 : index
    %c33 = arith.constant 33 : index
    %44 = vector.load %arg10[%c0_30, %c33] : memref<4x290xf32, #tpu.memory_space<vmem>>, vector<4x256xf32>
    %c28 = arith.constant 28 : index
    %c0_31 = arith.constant 0 : index
    %45 = vector.load %arg11[%c28, %c0_31] : memref<36x256xf32, #tpu.memory_space<vmem>>, vector<4x256xf32>
    tpu.vector_store %arg11[%c28, %c0_31], %44 {strides = array<i32>} : memref<36x256xf32, #tpu.memory_space<vmem>>, vector<4x256xf32>,
    %c0_32 = arith.constant 0 : index
    %c34 = arith.constant 34 : index
    %46 = vector.load %arg10[%c0_32, %c34] : memref<4x290xf32, #tpu.memory_space<vmem>>, vector<4x256xf32>
    %cst_33 = arith.constant 0.000000e+00 : f32
    %47 = vector.shape_cast %4 : vector<1x256xi1> to vector<1x256xi1>
    %48 = vector.broadcast %47 : vector<1x256xi1> to vector<4x256xi1>
    %49 = vector.broadcast %cst_33 : f32 to vector<4x256xf32>
    %50 = arith.select %48, %46, %49 : vector<4x256xi1>, vector<4x256xf32>
    %c32_34 = arith.constant 32 : index
    %c0_35 = arith.constant 0 : index
    %51 = vector.load %arg11[%c32_34, %c0_35] : memref<36x256xf32, #tpu.memory_space<vmem>>, vector<4x256xf32>
    tpu.vector_store %arg11[%c32_34, %c0_35], %50 {strides = array<i32>} : memref<36x256xf32, #tpu.memory_space<vmem>>, vector<4x256xf32>,
    %c0_36 = arith.constant 0 : index
    %c0_37 = arith.constant 0 : index
    %52 = vector.load %arg3[%c0_36, %c0_37] : memref<32x36xf32, #tpu.memory_space<vmem>>, vector<32x36xf32>
    %c0_38 = arith.constant 0 : index
    %c0_39 = arith.constant 0 : index
    %53 = vector.load %arg11[%c0_38, %c0_39] : memref<36x256xf32, #tpu.memory_space<vmem>>, vector<36x256xf32>
    %cst_40 = arith.constant dense<0.000000e+00> : vector<32x256xf32>
    %54 = tpu.matmul %52, %53, %cst_40 {dimension_numbers = #tpu.dot_dimension_numbers<[1], [0], [0], [1], [0, 0, 1, 1], [], []>} : vector<32x36xf32>, vector<36x256xf32>, vector<32x256xf32> -> vector<32x256xf32>
    %c0_41 = arith.constant 0 : index
    %c0_42 = arith.constant 0 : index
    %55 = vector.load %arg4[%c0_41, %c0_42] : memref<32x1xf32, #tpu.memory_space<vmem>>, vector<32x1xf32>
    %56 = vector.broadcast %55 : vector<32x1xf32> to vector<32x256xf32>
    %57 = arith.addf %54, %56 : vector<32x256xf32>
    %cst_43 = arith.constant 0.000000e+00 : f32
    %58 = vector.broadcast %cst_43 : f32 to vector<32x290xf32>
    %c0_44 = arith.constant 0 : index
    %c0_45 = arith.constant 0 : index
    %59 = vector.load %arg12[%c0_44, %c0_45] : memref<32x290xf32, #tpu.memory_space<vmem>>, vector<32x290xf32>
    tpu.vector_store %arg12[%c0_44, %c0_45], %58 {strides = array<i32>} : memref<32x290xf32, #tpu.memory_space<vmem>>, vector<32x290xf32>,
    %60 = vector.extract_strided_slice %57 {offsets = [0, 0], sizes = [16, 256], strides = [1, 1]} : vector<32x256xf32> to vector<16x256xf32>
    %cst_46 = arith.constant 0.000000e+00 : f32
    %61 = vector.broadcast %cst_46 : f32 to vector<16x256xf32>
    %62 = arith.cmpf oge, %60, %61 : vector<16x256xf32>
    %cst_47 = arith.constant 0.00999999977 : f32
    %63 = vector.broadcast %cst_47 : f32 to vector<16x256xf32>
    %64 = arith.mulf %63, %60 : vector<16x256xf32>
    %65 = arith.select %62, %60, %64 : vector<16x256xi1>, vector<16x256xf32>
    %c0_48 = arith.constant 0 : index
    %c17_49 = arith.constant 17 : index
    %66 = vector.load %arg12[%c0_48, %c17_49] : memref<32x290xf32, #tpu.memory_space<vmem>>, vector<16x256xf32>
    tpu.vector_store %arg12[%c0_48, %c17_49], %65 {strides = array<i32>} : memref<32x290xf32, #tpu.memory_space<vmem>>, vector<16x256xf32>,
    %67 = vector.extract_strided_slice %57 {offsets = [16, 0], sizes = [16, 256], strides = [1, 1]} : vector<32x256xf32> to vector<16x256xf32>
    %c16_50 = arith.constant 16 : index
    %c17_51 = arith.constant 17 : index
    %68 = vector.load %arg12[%c16_50, %c17_51] : memref<32x290xf32, #tpu.memory_space<vmem>>, vector<16x256xf32>
    tpu.vector_store %arg12[%c16_50, %c17_51], %67 {strides = array<i32>} : memref<32x290xf32, #tpu.memory_space<vmem>>, vector<16x256xf32>,
    %c12_52 = arith.constant 12 : index
    %c0_53 = arith.constant 0 : index
    %69 = vector.load %arg12[%c12_52, %c0_53] : memref<32x290xf32, #tpu.memory_space<vmem>>, vector<4x256xf32>
    %cst_54 = arith.constant 0.000000e+00 : f32
    %70 = vector.shape_cast %2 : vector<1x256xi1> to vector<1x256xi1>
    %71 = vector.broadcast %70 : vector<1x256xi1> to vector<4x256xi1>
    %72 = vector.broadcast %cst_54 : f32 to vector<4x256xf32>
    %73 = arith.select %71, %69, %72 : vector<4x256xi1>, vector<4x256xf32>
    %c0_55 = arith.constant 0 : index
    %c0_56 = arith.constant 0 : index
    %74 = vector.load %arg13[%c0_55, %c0_56] : memref<36x256xf32, #tpu.memory_space<vmem>>, vector<4x256xf32>
    tpu.vector_store %arg13[%c0_55, %c0_56], %73 {strides = array<i32>} : memref<36x256xf32, #tpu.memory_space<vmem>>, vector<4x256xf32>,
    %c8_57 = arith.constant 8 : index
    %c1_58 = arith.constant 1 : index
    %75 = vector.load %arg12[%c8_57, %c1_58] : memref<32x290xf32, #tpu.memory_space<vmem>>, vector<4x256xf32>
    %c4_59 = arith.constant 4 : index
    %c0_60 = arith.constant 0 : index
    %76 = vector.load %arg13[%c4_59, %c0_60] : memref<36x256xf32, #tpu.memory_space<vmem>>, vector<4x256xf32>
    tpu.vector_store %arg13[%c4_59, %c0_60], %75 {strides = array<i32>} : memref<36x256xf32, #tpu.memory_space<vmem>>, vector<4x256xf32>,
    %c12_61 = arith.constant 12 : index
    %c1_62 = arith.constant 1 : index
    %77 = vector.load %arg12[%c12_61, %c1_62] : memref<32x290xf32, #tpu.memory_space<vmem>>, vector<4x256xf32>
    %c8_63 = arith.constant 8 : index
    %c0_64 = arith.constant 0 : index
    %78 = vector.load %arg13[%c8_63, %c0_64] : memref<36x256xf32, #tpu.memory_space<vmem>>, vector<4x256xf32>
    tpu.vector_store %arg13[%c8_63, %c0_64], %77 {strides = array<i32>} : memref<36x256xf32, #tpu.memory_space<vmem>>, vector<4x256xf32>,
    %c4_65 = arith.constant 4 : index
    %c16_66 = arith.constant 16 : index
    %79 = vector.load %arg12[%c4_65, %c16_66] : memref<32x290xf32, #tpu.memory_space<vmem>>, vector<4x256xf32>
    %cst_67 = arith.constant 0.000000e+00 : f32
    %80 = vector.shape_cast %2 : vector<1x256xi1> to vector<1x256xi1>
    %81 = vector.broadcast %80 : vector<1x256xi1> to vector<4x256xi1>
    %82 = vector.broadcast %cst_67 : f32 to vector<4x256xf32>
    %83 = arith.select %81, %79, %82 : vector<4x256xi1>, vector<4x256xf32>
    %c12_68 = arith.constant 12 : index
    %c0_69 = arith.constant 0 : index
    %84 = vector.load %arg13[%c12_68, %c0_69] : memref<36x256xf32, #tpu.memory_space<vmem>>, vector<4x256xf32>
    tpu.vector_store %arg13[%c12_68, %c0_69], %83 {strides = array<i32>} : memref<36x256xf32, #tpu.memory_space<vmem>>, vector<4x256xf32>,
    %c0_70 = arith.constant 0 : index
    %c17_71 = arith.constant 17 : index
    %85 = vector.load %arg12[%c0_70, %c17_71] : memref<32x290xf32, #tpu.memory_space<vmem>>, vector<4x256xf32>
    %c16_72 = arith.constant 16 : index
    %c0_73 = arith.constant 0 : index
    %86 = vector.load %arg13[%c16_72, %c0_73] : memref<36x256xf32, #tpu.memory_space<vmem>>, vector<4x256xf32>
    tpu.vector_store %arg13[%c16_72, %c0_73], %85 {strides = array<i32>} : memref<36x256xf32, #tpu.memory_space<vmem>>, vector<4x256xf32>,
    %c4_74 = arith.constant 4 : index
    %c17_75 = arith.constant 17 : index
    %87 = vector.load %arg12[%c4_74, %c17_75] : memref<32x290xf32, #tpu.memory_space<vmem>>, vector<4x256xf32>
    %c20_76 = arith.constant 20 : index
    %c0_77 = arith.constant 0 : index
    %88 = vector.load %arg13[%c20_76, %c0_77] : memref<36x256xf32, #tpu.memory_space<vmem>>, vector<4x256xf32>
    tpu.vector_store %arg13[%c20_76, %c0_77], %87 {strides = array<i32>} : memref<36x256xf32, #tpu.memory_space<vmem>>, vector<4x256xf32>,
    %c12_78 = arith.constant 12 : index
    %c16_79 = arith.constant 16 : index
    %89 = vector.load %arg12[%c12_78, %c16_79] : memref<32x290xf32, #tpu.memory_space<vmem>>, vector<4x256xf32>
    %cst_80 = arith.constant 0.000000e+00 : f32
    %90 = vector.shape_cast %2 : vector<1x256xi1> to vector<1x256xi1>
    %91 = vector.broadcast %90 : vector<1x256xi1> to vector<4x256xi1>
    %92 = vector.broadcast %cst_80 : f32 to vector<4x256xf32>
    %93 = arith.select %91, %89, %92 : vector<4x256xi1>, vector<4x256xf32>
    %c24_81 = arith.constant 24 : index
    %c0_82 = arith.constant 0 : index
    %94 = vector.load %arg13[%c24_81, %c0_82] : memref<36x256xf32, #tpu.memory_space<vmem>>, vector<4x256xf32>
    tpu.vector_store %arg13[%c24_81, %c0_82], %93 {strides = array<i32>} : memref<36x256xf32, #tpu.memory_space<vmem>>, vector<4x256xf32>,
    %c8_83 = arith.constant 8 : index
    %c17_84 = arith.constant 17 : index
    %95 = vector.load %arg12[%c8_83, %c17_84] : memref<32x290xf32, #tpu.memory_space<vmem>>, vector<4x256xf32>
    %c28_85 = arith.constant 28 : index
    %c0_86 = arith.constant 0 : index
    %96 = vector.load %arg13[%c28_85, %c0_86] : memref<36x256xf32, #tpu.memory_space<vmem>>, vector<4x256xf32>
    tpu.vector_store %arg13[%c28_85, %c0_86], %95 {strides = array<i32>} : memref<36x256xf32, #tpu.memory_space<vmem>>, vector<4x256xf32>,
    %c12_87 = arith.constant 12 : index
    %c17_88 = arith.constant 17 : index
    %97 = vector.load %arg12[%c12_87, %c17_88] : memref<32x290xf32, #tpu.memory_space<vmem>>, vector<4x256xf32>
    %c32_89 = arith.constant 32 : index
    %c0_90 = arith.constant 0 : index
    %98 = vector.load %arg13[%c32_89, %c0_90] : memref<36x256xf32, #tpu.memory_space<vmem>>, vector<4x256xf32>
    tpu.vector_store %arg13[%c32_89, %c0_90], %97 {strides = array<i32>} : memref<36x256xf32, #tpu.memory_space<vmem>>, vector<4x256xf32>,
    %c0_91 = arith.constant 0 : index
    %c0_92 = arith.constant 0 : index
    %99 = vector.load %arg5[%c0_91, %c0_92] : memref<4x36xf32, #tpu.memory_space<vmem>>, vector<4x36xf32>
    %c0_93 = arith.constant 0 : index
    %c0_94 = arith.constant 0 : index
    %100 = vector.load %arg13[%c0_93, %c0_94] : memref<36x256xf32, #tpu.memory_space<vmem>>, vector<36x256xf32>
    %cst_95 = arith.constant dense<0.000000e+00> : vector<4x256xf32>
    %101 = tpu.matmul %99, %100, %cst_95 {dimension_numbers = #tpu.dot_dimension_numbers<[1], [0], [0], [1], [0, 0, 1, 1], [], []>} : vector<4x36xf32>, vector<36x256xf32>, vector<4x256xf32> -> vector<4x256xf32>
    %c0_96 = arith.constant 0 : index
    %c0_97 = arith.constant 0 : index
    %102 = vector.load %arg6[%c0_96, %c0_97] : memref<4x1xf32, #tpu.memory_space<vmem>>, vector<4x1xf32>
    %103 = vector.broadcast %102 : vector<4x1xf32> to vector<4x256xf32>
    %104 = arith.addf %101, %103 : vector<4x256xf32>
    %c0_98 = arith.constant 0 : index
    %c0_99 = arith.constant 0 : index
    %105 = vector.load %arg7[%c0_98, %c0_99] : memref<4x4xf32, #tpu.memory_space<vmem>>, vector<4x4xf32>
    %106 = arith.mulf %104, %104 : vector<4x256xf32>
    %cst_100 = arith.constant dense<0.000000e+00> : vector<4x256xf32>
    %107 = tpu.matmul %105, %106, %cst_100 {dimension_numbers = #tpu.dot_dimension_numbers<[1], [0], [0], [1], [0, 0, 1, 1], [], []>} : vector<4x4xf32>, vector<4x256xf32>, vector<4x256xf32> -> vector<4x256xf32>
    %c0_101 = arith.constant 0 : index
    %c0_102 = arith.constant 0 : index
    %108 = vector.load %arg8[%c0_101, %c0_102] : memref<4x1xf32, #tpu.memory_space<vmem>>, vector<4x1xf32>
    %109 = vector.broadcast %108 : vector<4x1xf32> to vector<4x256xf32>
    %110 = arith.addf %107, %109 : vector<4x256xf32>
    %cst_103 = arith.constant 0.000000e+00 : f32
    %111 = vector.broadcast %cst_103 : f32 to vector<4x256xf32>
    %112 = arith.maximumf %110, %111 : vector<4x256xf32>
    %c16_104 = arith.constant 16 : index
    %c17_105 = arith.constant 17 : index
    %113 = vector.load %arg12[%c16_104, %c17_105] : memref<32x290xf32, #tpu.memory_space<vmem>>, vector<4x256xf32>
    %114 = math.sqrt %112 : vector<4x256xf32>
    %115 = arith.mulf %104, %114 : vector<4x256xf32>
    %116 = arith.addf %115, %113 : vector<4x256xf32>
    %c0_106 = arith.constant 0 : index
    %c0_107 = arith.constant 0 : index
    %c0_108 = arith.constant 0 : index
    %c0_109 = arith.constant 0 : index
    %c0_110 = arith.constant 0 : index
    %117 = vector.load %arg9[%c0_106, %c0_107, %c0_108, %c0_109, %c0_110] : memref<1x2x2x4x256xf32, #tpu.memory_space<vmem>>, vector<1x1x1x4x256xf32>
    %118 = vector.shape_cast %117 : vector<1x1x1x4x256xf32> to vector<4x256xf32>
    %119 = vector.shape_cast %116 : vector<4x256xf32> to vector<1x1x1x4x256xf32>
    tpu.vector_store %arg9[%c0_106, %c0_107, %c0_108, %c0_109, %c0_110], %119 {strides = array<i32>} : memref<1x2x2x4x256xf32, #tpu.memory_space<vmem>>, vector<1x1x1x4x256xf32>,
    %c8_111 = arith.constant 8 : index
    %c1_112 = arith.constant 1 : index
    %120 = vector.load %arg12[%c8_111, %c1_112] : memref<32x290xf32, #tpu.memory_space<vmem>>, vector<4x256xf32>
    %c0_113 = arith.constant 0 : index
    %c0_114 = arith.constant 0 : index
    %121 = vector.load %arg13[%c0_113, %c0_114] : memref<36x256xf32, #tpu.memory_space<vmem>>, vector<4x256xf32>
    tpu.vector_store %arg13[%c0_113, %c0_114], %120 {strides = array<i32>} : memref<36x256xf32, #tpu.memory_space<vmem>>, vector<4x256xf32>,
    %c12_115 = arith.constant 12 : index
    %c1_116 = arith.constant 1 : index
    %122 = vector.load %arg12[%c12_115, %c1_116] : memref<32x290xf32, #tpu.memory_space<vmem>>, vector<4x256xf32>
    %c4_117 = arith.constant 4 : index
    %c0_118 = arith.constant 0 : index
    %123 = vector.load %arg13[%c4_117, %c0_118] : memref<36x256xf32, #tpu.memory_space<vmem>>, vector<4x256xf32>
    tpu.vector_store %arg13[%c4_117, %c0_118], %122 {strides = array<i32>} : memref<36x256xf32, #tpu.memory_space<vmem>>, vector<4x256xf32>,
    %c8_119 = arith.constant 8 : index
    %c2_120 = arith.constant 2 : index
    %124 = vector.load %arg12[%c8_119, %c2_120] : memref<32x290xf32, #tpu.memory_space<vmem>>, vector<4x256xf32>
    %cst_121 = arith.constant 0.000000e+00 : f32
    %125 = vector.shape_cast %4 : vector<1x256xi1> to vector<1x256xi1>
    %126 = vector.broadcast %125 : vector<1x256xi1> to vector<4x256xi1>
    %127 = vector.broadcast %cst_121 : f32 to vector<4x256xf32>
    %128 = arith.select %126, %124, %127 : vector<4x256xi1>, vector<4x256xf32>
    %c8_122 = arith.constant 8 : index
    %c0_123 = arith.constant 0 : index
    %129 = vector.load %arg13[%c8_122, %c0_123] : memref<36x256xf32, #tpu.memory_space<vmem>>, vector<4x256xf32>
    tpu.vector_store %arg13[%c8_122, %c0_123], %128 {strides = array<i32>} : memref<36x256xf32, #tpu.memory_space<vmem>>, vector<4x256xf32>,
    %c0_124 = arith.constant 0 : index
    %c17_125 = arith.constant 17 : index
    %130 = vector.load %arg12[%c0_124, %c17_125] : memref<32x290xf32, #tpu.memory_space<vmem>>, vector<4x256xf32>
    %c12_126 = arith.constant 12 : index
    %c0_127 = arith.constant 0 : index
    %131 = vector.load %arg13[%c12_126, %c0_127] : memref<36x256xf32, #tpu.memory_space<vmem>>, vector<4x256xf32>
    tpu.vector_store %arg13[%c12_126, %c0_127], %130 {strides = array<i32>} : memref<36x256xf32, #tpu.memory_space<vmem>>, vector<4x256xf32>,
    %c4_128 = arith.constant 4 : index
    %c17_129 = arith.constant 17 : index
    %132 = vector.load %arg12[%c4_128, %c17_129] : memref<32x290xf32, #tpu.memory_space<vmem>>, vector<4x256xf32>
    %c16_130 = arith.constant 16 : index
    %c0_131 = arith.constant 0 : index
    %133 = vector.load %arg13[%c16_130, %c0_131] : memref<36x256xf32, #tpu.memory_space<vmem>>, vector<4x256xf32>
    tpu.vector_store %arg13[%c16_130, %c0_131], %132 {strides = array<i32>} : memref<36x256xf32, #tpu.memory_space<vmem>>, vector<4x256xf32>,
    %c0_132 = arith.constant 0 : index
    %c18_133 = arith.constant 18 : index
    %134 = vector.load %arg12[%c0_132, %c18_133] : memref<32x290xf32, #tpu.memory_space<vmem>>, vector<4x256xf32>
    %cst_134 = arith.constant 0.000000e+00 : f32
    %135 = vector.shape_cast %4 : vector<1x256xi1> to vector<1x256xi1>
    %136 = vector.broadcast %135 : vector<1x256xi1> to vector<4x256xi1>
    %137 = vector.broadcast %cst_134 : f32 to vector<4x256xf32>
    %138 = arith.select %136, %134, %137 : vector<4x256xi1>, vector<4x256xf32>
    %c20_135 = arith.constant 20 : index
    %c0_136 = arith.constant 0 : index
    %139 = vector.load %arg13[%c20_135, %c0_136] : memref<36x256xf32, #tpu.memory_space<vmem>>, vector<4x256xf32>
    tpu.vector_store %arg13[%c20_135, %c0_136], %138 {strides = array<i32>} : memref<36x256xf32, #tpu.memory_space<vmem>>, vector<4x256xf32>,
    %c8_137 = arith.constant 8 : index
    %c17_138 = arith.constant 17 : index
    %140 = vector.load %arg12[%c8_137, %c17_138] : memref<32x290xf32, #tpu.memory_space<vmem>>, vector<4x256xf32>
    %c24_139 = arith.constant 24 : index
    %c0_140 = arith.constant 0 : index
    %141 = vector.load %arg13[%c24_139, %c0_140] : memref<36x256xf32, #tpu.memory_space<vmem>>, vector<4x256xf32>
    tpu.vector_store %arg13[%c24_139, %c0_140], %140 {strides = array<i32>} : memref<36x256xf32, #tpu.memory_space<vmem>>, vector<4x256xf32>,
    %c12_141 = arith.constant 12 : index
    %c17_142 = arith.constant 17 : index
    %142 = vector.load %arg12[%c12_141, %c17_142] : memref<32x290xf32, #tpu.memory_space<vmem>>, vector<4x256xf32>
    %c28_143 = arith.constant 28 : index
    %c0_144 = arith.constant 0 : index
    %143 = vector.load %arg13[%c28_143, %c0_144] : memref<36x256xf32, #tpu.memory_space<vmem>>, vector<4x256xf32>
    tpu.vector_store %arg13[%c28_143, %c0_144], %142 {strides = array<i32>} : memref<36x256xf32, #tpu.memory_space<vmem>>, vector<4x256xf32>,
    %c8_145 = arith.constant 8 : index
    %c18_146 = arith.constant 18 : index
    %144 = vector.load %arg12[%c8_145, %c18_146] : memref<32x290xf32, #tpu.memory_space<vmem>>, vector<4x256xf32>
    %cst_147 = arith.constant 0.000000e+00 : f32
    %145 = vector.shape_cast %4 : vector<1x256xi1> to vector<1x256xi1>
    %146 = vector.broadcast %145 : vector<1x256xi1> to vector<4x256xi1>
    %147 = vector.broadcast %cst_147 : f32 to vector<4x256xf32>
    %148 = arith.select %146, %144, %147 : vector<4x256xi1>, vector<4x256xf32>
    %c32_148 = arith.constant 32 : index
    %c0_149 = arith.constant 0 : index
    %149 = vector.load %arg13[%c32_148, %c0_149] : memref<36x256xf32, #tpu.memory_space<vmem>>, vector<4x256xf32>
    tpu.vector_store %arg13[%c32_148, %c0_149], %148 {strides = array<i32>} : memref<36x256xf32, #tpu.memory_space<vmem>>, vector<4x256xf32>,
    %c0_150 = arith.constant 0 : index
    %c0_151 = arith.constant 0 : index
    %150 = vector.load %arg5[%c0_150, %c0_151] : memref<4x36xf32, #tpu.memory_space<vmem>>, vector<4x36xf32>
    %c0_152 = arith.constant 0 : index
    %c0_153 = arith.constant 0 : index
    %151 = vector.load %arg13[%c0_152, %c0_153] : memref<36x256xf32, #tpu.memory_space<vmem>>, vector<36x256xf32>
    %cst_154 = arith.constant dense<0.000000e+00> : vector<4x256xf32>
    %152 = tpu.matmul %150, %151, %cst_154 {dimension_numbers = #tpu.dot_dimension_numbers<[1], [0], [0], [1], [0, 0, 1, 1], [], []>} : vector<4x36xf32>, vector<36x256xf32>, vector<4x256xf32> -> vector<4x256xf32>
    %c0_155 = arith.constant 0 : index
    %c0_156 = arith.constant 0 : index
    %153 = vector.load %arg6[%c0_155, %c0_156] : memref<4x1xf32, #tpu.memory_space<vmem>>, vector<4x1xf32>
    %154 = vector.broadcast %153 : vector<4x1xf32> to vector<4x256xf32>
    %155 = arith.addf %152, %154 : vector<4x256xf32>
    %c0_157 = arith.constant 0 : index
    %c0_158 = arith.constant 0 : index
    %156 = vector.load %arg7[%c0_157, %c0_158] : memref<4x4xf32, #tpu.memory_space<vmem>>, vector<4x4xf32>
    %157 = arith.mulf %155, %155 : vector<4x256xf32>
    %cst_159 = arith.constant dense<0.000000e+00> : vector<4x256xf32>
    %158 = tpu.matmul %156, %157, %cst_159 {dimension_numbers = #tpu.dot_dimension_numbers<[1], [0], [0], [1], [0, 0, 1, 1], [], []>} : vector<4x4xf32>, vector<4x256xf32>, vector<4x256xf32> -> vector<4x256xf32>
    %c0_160 = arith.constant 0 : index
    %c0_161 = arith.constant 0 : index
    %159 = vector.load %arg8[%c0_160, %c0_161] : memref<4x1xf32, #tpu.memory_space<vmem>>, vector<4x1xf32>
    %160 = vector.broadcast %159 : vector<4x1xf32> to vector<4x256xf32>
    %161 = arith.addf %158, %160 : vector<4x256xf32>
    %cst_162 = arith.constant 0.000000e+00 : f32
    %162 = vector.broadcast %cst_162 : f32 to vector<4x256xf32>
    %163 = arith.maximumf %161, %162 : vector<4x256xf32>
    %c20_163 = arith.constant 20 : index
    %c17_164 = arith.constant 17 : index
    %164 = vector.load %arg12[%c20_163, %c17_164] : memref<32x290xf32, #tpu.memory_space<vmem>>, vector<4x256xf32>
    %165 = math.sqrt %163 : vector<4x256xf32>
    %166 = arith.mulf %155, %165 : vector<4x256xf32>
    %167 = arith.addf %166, %164 : vector<4x256xf32>
    %c0_165 = arith.constant 0 : index
    %c0_166 = arith.constant 0 : index
    %c1_167 = arith.constant 1 : index
    %c0_168 = arith.constant 0 : index
    %c0_169 = arith.constant 0 : index
    %168 = vector.load %arg9[%c0_165, %c0_166, %c1_167, %c0_168, %c0_169] : memref<1x2x2x4x256xf32, #tpu.memory_space<vmem>>, vector<1x1x1x4x256xf32>
    %169 = vector.shape_cast %168 : vector<1x1x1x4x256xf32> to vector<4x256xf32>
    %170 = vector.shape_cast %167 : vector<4x256xf32> to vector<1x1x1x4x256xf32>
    tpu.vector_store %arg9[%c0_165, %c0_166, %c1_167, %c0_168, %c0_169], %170 {strides = array<i32>} : memref<1x2x2x4x256xf32, #tpu.memory_space<vmem>>, vector<1x1x1x4x256xf32>,
    %c4_170 = arith.constant 4 : index
    %c16_171 = arith.constant 16 : index
    %171 = vector.load %arg12[%c4_170, %c16_171] : memref<32x290xf32, #tpu.memory_space<vmem>>, vector<4x256xf32>
    %cst_172 = arith.constant 0.000000e+00 : f32
    %172 = vector.shape_cast %2 : vector<1x256xi1> to vector<1x256xi1>
    %173 = vector.broadcast %172 : vector<1x256xi1> to vector<4x256xi1>
    %174 = vector.broadcast %cst_172 : f32 to vector<4x256xf32>
    %175 = arith.select %173, %171, %174 : vector<4x256xi1>, vector<4x256xf32>
    %c0_173 = arith.constant 0 : index
    %c0_174 = arith.constant 0 : index
    %176 = vector.load %arg13[%c0_173, %c0_174] : memref<36x256xf32, #tpu.memory_space<vmem>>, vector<4x256xf32>
    tpu.vector_store %arg13[%c0_173, %c0_174], %175 {strides = array<i32>} : memref<36x256xf32, #tpu.memory_space<vmem>>, vector<4x256xf32>,
    %c0_175 = arith.constant 0 : index
    %c17_176 = arith.constant 17 : index
    %177 = vector.load %arg12[%c0_175, %c17_176] : memref<32x290xf32, #tpu.memory_space<vmem>>, vector<4x256xf32>
    %c4_177 = arith.constant 4 : index
    %c0_178 = arith.constant 0 : index
    %178 = vector.load %arg13[%c4_177, %c0_178] : memref<36x256xf32, #tpu.memory_space<vmem>>, vector<4x256xf32>
    tpu.vector_store %arg13[%c4_177, %c0_178], %177 {strides = array<i32>} : memref<36x256xf32, #tpu.memory_space<vmem>>, vector<4x256xf32>,
    %c4_179 = arith.constant 4 : index
    %c17_180 = arith.constant 17 : index
    %179 = vector.load %arg12[%c4_179, %c17_180] : memref<32x290xf32, #tpu.memory_space<vmem>>, vector<4x256xf32>
    %c8_181 = arith.constant 8 : index
    %c0_182 = arith.constant 0 : index
    %180 = vector.load %arg13[%c8_181, %c0_182] : memref<36x256xf32, #tpu.memory_space<vmem>>, vector<4x256xf32>
    tpu.vector_store %arg13[%c8_181, %c0_182], %179 {strides = array<i32>} : memref<36x256xf32, #tpu.memory_space<vmem>>, vector<4x256xf32>,
    %c12_183 = arith.constant 12 : index
    %c16_184 = arith.constant 16 : index
    %181 = vector.load %arg12[%c12_183, %c16_184] : memref<32x290xf32, #tpu.memory_space<vmem>>, vector<4x256xf32>
    %cst_185 = arith.constant 0.000000e+00 : f32
    %182 = vector.shape_cast %2 : vector<1x256xi1> to vector<1x256xi1>
    %183 = vector.broadcast %182 : vector<1x256xi1> to vector<4x256xi1>
    %184 = vector.broadcast %cst_185 : f32 to vector<4x256xf32>
    %185 = arith.select %183, %181, %184 : vector<4x256xi1>, vector<4x256xf32>
    %c12_186 = arith.constant 12 : index
    %c0_187 = arith.constant 0 : index
    %186 = vector.load %arg13[%c12_186, %c0_187] : memref<36x256xf32, #tpu.memory_space<vmem>>, vector<4x256xf32>
    tpu.vector_store %arg13[%c12_186, %c0_187], %185 {strides = array<i32>} : memref<36x256xf32, #tpu.memory_space<vmem>>, vector<4x256xf32>,
    %c8_188 = arith.constant 8 : index
    %c17_189 = arith.constant 17 : index
    %187 = vector.load %arg12[%c8_188, %c17_189] : memref<32x290xf32, #tpu.memory_space<vmem>>, vector<4x256xf32>
    %c16_190 = arith.constant 16 : index
    %c0_191 = arith.constant 0 : index
    %188 = vector.load %arg13[%c16_190, %c0_191] : memref<36x256xf32, #tpu.memory_space<vmem>>, vector<4x256xf32>
    tpu.vector_store %arg13[%c16_190, %c0_191], %187 {strides = array<i32>} : memref<36x256xf32, #tpu.memory_space<vmem>>, vector<4x256xf32>,
    %c12_192 = arith.constant 12 : index
    %c17_193 = arith.constant 17 : index
    %189 = vector.load %arg12[%c12_192, %c17_193] : memref<32x290xf32, #tpu.memory_space<vmem>>, vector<4x256xf32>
    %c20_194 = arith.constant 20 : index
    %c0_195 = arith.constant 0 : index
    %190 = vector.load %arg13[%c20_194, %c0_195] : memref<36x256xf32, #tpu.memory_space<vmem>>, vector<4x256xf32>
    tpu.vector_store %arg13[%c20_194, %c0_195], %189 {strides = array<i32>} : memref<36x256xf32, #tpu.memory_space<vmem>>, vector<4x256xf32>,
    %c4_196 = arith.constant 4 : index
    %c32_197 = arith.constant 32 : index
    %191 = vector.load %arg12[%c4_196, %c32_197] : memref<32x290xf32, #tpu.memory_space<vmem>>, vector<4x256xf32>
    %cst_198 = arith.constant 0.000000e+00 : f32
    %192 = vector.shape_cast %2 : vector<1x256xi1> to vector<1x256xi1>
    %193 = vector.broadcast %192 : vector<1x256xi1> to vector<4x256xi1>
    %194 = vector.broadcast %cst_198 : f32 to vector<4x256xf32>
    %195 = arith.select %193, %191, %194 : vector<4x256xi1>, vector<4x256xf32>
    %c24_199 = arith.constant 24 : index
    %c0_200 = arith.constant 0 : index
    %196 = vector.load %arg13[%c24_199, %c0_200] : memref<36x256xf32, #tpu.memory_space<vmem>>, vector<4x256xf32>
    tpu.vector_store %arg13[%c24_199, %c0_200], %195 {strides = array<i32>} : memref<36x256xf32, #tpu.memory_space<vmem>>, vector<4x256xf32>,
    %c0_201 = arith.constant 0 : index
    %c33_202 = arith.constant 33 : index
    %197 = vector.load %arg12[%c0_201, %c33_202] : memref<32x290xf32, #tpu.memory_space<vmem>>, vector<4x256xf32>
    %c28_203 = arith.constant 28 : index
    %c0_204 = arith.constant 0 : index
    %198 = vector.load %arg13[%c28_203, %c0_204] : memref<36x256xf32, #tpu.memory_space<vmem>>, vector<4x256xf32>
    tpu.vector_store %arg13[%c28_203, %c0_204], %197 {strides = array<i32>} : memref<36x256xf32, #tpu.memory_space<vmem>>, vector<4x256xf32>,
    %c4_205 = arith.constant 4 : index
    %c33_206 = arith.constant 33 : index
    %199 = vector.load %arg12[%c4_205, %c33_206] : memref<32x290xf32, #tpu.memory_space<vmem>>, vector<4x256xf32>
    %c32_207 = arith.constant 32 : index
    %c0_208 = arith.constant 0 : index
    %200 = vector.load %arg13[%c32_207, %c0_208] : memref<36x256xf32, #tpu.memory_space<vmem>>, vector<4x256xf32>
    tpu.vector_store %arg13[%c32_207, %c0_208], %199 {strides = array<i32>} : memref<36x256xf32, #tpu.memory_space<vmem>>, vector<4x256xf32>,
    %c0_209 = arith.constant 0 : index
    %c0_210 = arith.constant 0 : index
    %201 = vector.load %arg5[%c0_209, %c0_210] : memref<4x36xf32, #tpu.memory_space<vmem>>, vector<4x36xf32>
    %c0_211 = arith.constant 0 : index
    %c0_212 = arith.constant 0 : index
    %202 = vector.load %arg13[%c0_211, %c0_212] : memref<36x256xf32, #tpu.memory_space<vmem>>, vector<36x256xf32>
    %cst_213 = arith.constant dense<0.000000e+00> : vector<4x256xf32>
    %203 = tpu.matmul %201, %202, %cst_213 {dimension_numbers = #tpu.dot_dimension_numbers<[1], [0], [0], [1], [0, 0, 1, 1], [], []>} : vector<4x36xf32>, vector<36x256xf32>, vector<4x256xf32> -> vector<4x256xf32>
    %c0_214 = arith.constant 0 : index
    %c0_215 = arith.constant 0 : index
    %204 = vector.load %arg6[%c0_214, %c0_215] : memref<4x1xf32, #tpu.memory_space<vmem>>, vector<4x1xf32>
    %205 = vector.broadcast %204 : vector<4x1xf32> to vector<4x256xf32>
    %206 = arith.addf %203, %205 : vector<4x256xf32>
    %c0_216 = arith.constant 0 : index
    %c0_217 = arith.constant 0 : index
    %207 = vector.load %arg7[%c0_216, %c0_217] : memref<4x4xf32, #tpu.memory_space<vmem>>, vector<4x4xf32>
    %208 = arith.mulf %206, %206 : vector<4x256xf32>
    %cst_218 = arith.constant dense<0.000000e+00> : vector<4x256xf32>
    %209 = tpu.matmul %207, %208, %cst_218 {dimension_numbers = #tpu.dot_dimension_numbers<[1], [0], [0], [1], [0, 0, 1, 1], [], []>} : vector<4x4xf32>, vector<4x256xf32>, vector<4x256xf32> -> vector<4x256xf32>
    %c0_219 = arith.constant 0 : index
    %c0_220 = arith.constant 0 : index
    %210 = vector.load %arg8[%c0_219, %c0_220] : memref<4x1xf32, #tpu.memory_space<vmem>>, vector<4x1xf32>
    %211 = vector.broadcast %210 : vector<4x1xf32> to vector<4x256xf32>
    %212 = arith.addf %209, %211 : vector<4x256xf32>
    %cst_221 = arith.constant 0.000000e+00 : f32
    %213 = vector.broadcast %cst_221 : f32 to vector<4x256xf32>
    %214 = arith.maximumf %212, %213 : vector<4x256xf32>
    %c24_222 = arith.constant 24 : index
    %c17_223 = arith.constant 17 : index
    %215 = vector.load %arg12[%c24_222, %c17_223] : memref<32x290xf32, #tpu.memory_space<vmem>>, vector<4x256xf32>
    %216 = math.sqrt %214 : vector<4x256xf32>
    %217 = arith.mulf %206, %216 : vector<4x256xf32>
    %218 = arith.addf %217, %215 : vector<4x256xf32>
    %c0_224 = arith.constant 0 : index
    %c1_225 = arith.constant 1 : index
    %c0_226 = arith.constant 0 : index
    %c0_227 = arith.constant 0 : index
    %c0_228 = arith.constant 0 : index
    %219 = vector.load %arg9[%c0_224, %c1_225, %c0_226, %c0_227, %c0_228] : memref<1x2x2x4x256xf32, #tpu.memory_space<vmem>>, vector<1x1x1x4x256xf32>
    %220 = vector.shape_cast %219 : vector<1x1x1x4x256xf32> to vector<4x256xf32>
    %221 = vector.shape_cast %218 : vector<4x256xf32> to vector<1x1x1x4x256xf32>
    tpu.vector_store %arg9[%c0_224, %c1_225, %c0_226, %c0_227, %c0_228], %221 {strides = array<i32>} : memref<1x2x2x4x256xf32, #tpu.memory_space<vmem>>, vector<1x1x1x4x256xf32>,
    %c0_229 = arith.constant 0 : index
    %c17_230 = arith.constant 17 : index
    %222 = vector.load %arg12[%c0_229, %c17_230] : memref<32x290xf32, #tpu.memory_space<vmem>>, vector<4x256xf32>
    %c0_231 = arith.constant 0 : index
    %c0_232 = arith.constant 0 : index
    %223 = vector.load %arg13[%c0_231, %c0_232] : memref<36x256xf32, #tpu.memory_space<vmem>>, vector<4x256xf32>
    tpu.vector_store %arg13[%c0_231, %c0_232], %222 {strides = array<i32>} : memref<36x256xf32, #tpu.memory_space<vmem>>, vector<4x256xf32>,
    %c4_233 = arith.constant 4 : index
    %c17_234 = arith.constant 17 : index
    %224 = vector.load %arg12[%c4_233, %c17_234] : memref<32x290xf32, #tpu.memory_space<vmem>>, vector<4x256xf32>
    %c4_235 = arith.constant 4 : index
    %c0_236 = arith.constant 0 : index
    %225 = vector.load %arg13[%c4_235, %c0_236] : memref<36x256xf32, #tpu.memory_space<vmem>>, vector<4x256xf32>
    tpu.vector_store %arg13[%c4_235, %c0_236], %224 {strides = array<i32>} : memref<36x256xf32, #tpu.memory_space<vmem>>, vector<4x256xf32>,
    %c0_237 = arith.constant 0 : index
    %c18_238 = arith.constant 18 : index
    %226 = vector.load %arg12[%c0_237, %c18_238] : memref<32x290xf32, #tpu.memory_space<vmem>>, vector<4x256xf32>
    %cst_239 = arith.constant 0.000000e+00 : f32
    %227 = vector.shape_cast %4 : vector<1x256xi1> to vector<1x256xi1>
    %228 = vector.broadcast %227 : vector<1x256xi1> to vector<4x256xi1>
    %229 = vector.broadcast %cst_239 : f32 to vector<4x256xf32>
    %230 = arith.select %228, %226, %229 : vector<4x256xi1>, vector<4x256xf32>
    %c8_240 = arith.constant 8 : index
    %c0_241 = arith.constant 0 : index
    %231 = vector.load %arg13[%c8_240, %c0_241] : memref<36x256xf32, #tpu.memory_space<vmem>>, vector<4x256xf32>
    tpu.vector_store %arg13[%c8_240, %c0_241], %230 {strides = array<i32>} : memref<36x256xf32, #tpu.memory_space<vmem>>, vector<4x256xf32>,
    %c8_242 = arith.constant 8 : index
    %c17_243 = arith.constant 17 : index
    %232 = vector.load %arg12[%c8_242, %c17_243] : memref<32x290xf32, #tpu.memory_space<vmem>>, vector<4x256xf32>
    %c12_244 = arith.constant 12 : index
    %c0_245 = arith.constant 0 : index
    %233 = vector.load %arg13[%c12_244, %c0_245] : memref<36x256xf32, #tpu.memory_space<vmem>>, vector<4x256xf32>
    tpu.vector_store %arg13[%c12_244, %c0_245], %232 {strides = array<i32>} : memref<36x256xf32, #tpu.memory_space<vmem>>, vector<4x256xf32>,
    %c12_246 = arith.constant 12 : index
    %c17_247 = arith.constant 17 : index
    %234 = vector.load %arg12[%c12_246, %c17_247] : memref<32x290xf32, #tpu.memory_space<vmem>>, vector<4x256xf32>
    %c16_248 = arith.constant 16 : index
    %c0_249 = arith.constant 0 : index
    %235 = vector.load %arg13[%c16_248, %c0_249] : memref<36x256xf32, #tpu.memory_space<vmem>>, vector<4x256xf32>
    tpu.vector_store %arg13[%c16_248, %c0_249], %234 {strides = array<i32>} : memref<36x256xf32, #tpu.memory_space<vmem>>, vector<4x256xf32>,
    %c8_250 = arith.constant 8 : index
    %c18_251 = arith.constant 18 : index
    %236 = vector.load %arg12[%c8_250, %c18_251] : memref<32x290xf32, #tpu.memory_space<vmem>>, vector<4x256xf32>
    %cst_252 = arith.constant 0.000000e+00 : f32
    %237 = vector.shape_cast %4 : vector<1x256xi1> to vector<1x256xi1>
    %238 = vector.broadcast %237 : vector<1x256xi1> to vector<4x256xi1>
    %239 = vector.broadcast %cst_252 : f32 to vector<4x256xf32>
    %240 = arith.select %238, %236, %239 : vector<4x256xi1>, vector<4x256xf32>
    %c20_253 = arith.constant 20 : index
    %c0_254 = arith.constant 0 : index
    %241 = vector.load %arg13[%c20_253, %c0_254] : memref<36x256xf32, #tpu.memory_space<vmem>>, vector<4x256xf32>
    tpu.vector_store %arg13[%c20_253, %c0_254], %240 {strides = array<i32>} : memref<36x256xf32, #tpu.memory_space<vmem>>, vector<4x256xf32>,
    %c0_255 = arith.constant 0 : index
    %c33_256 = arith.constant 33 : index
    %242 = vector.load %arg12[%c0_255, %c33_256] : memref<32x290xf32, #tpu.memory_space<vmem>>, vector<4x256xf32>
    %c24_257 = arith.constant 24 : index
    %c0_258 = arith.constant 0 : index
    %243 = vector.load %arg13[%c24_257, %c0_258] : memref<36x256xf32, #tpu.memory_space<vmem>>, vector<4x256xf32>
    tpu.vector_store %arg13[%c24_257, %c0_258], %242 {strides = array<i32>} : memref<36x256xf32, #tpu.memory_space<vmem>>, vector<4x256xf32>,
    %c4_259 = arith.constant 4 : index
    %c33_260 = arith.constant 33 : index
    %244 = vector.load %arg12[%c4_259, %c33_260] : memref<32x290xf32, #tpu.memory_space<vmem>>, vector<4x256xf32>
    %c28_261 = arith.constant 28 : index
    %c0_262 = arith.constant 0 : index
    %245 = vector.load %arg13[%c28_261, %c0_262] : memref<36x256xf32, #tpu.memory_space<vmem>>, vector<4x256xf32>
    tpu.vector_store %arg13[%c28_261, %c0_262], %244 {strides = array<i32>} : memref<36x256xf32, #tpu.memory_space<vmem>>, vector<4x256xf32>,
    %c0_263 = arith.constant 0 : index
    %c34_264 = arith.constant 34 : index
    %246 = vector.load %arg12[%c0_263, %c34_264] : memref<32x290xf32, #tpu.memory_space<vmem>>, vector<4x256xf32>
    %cst_265 = arith.constant 0.000000e+00 : f32
    %247 = vector.shape_cast %4 : vector<1x256xi1> to vector<1x256xi1>
    %248 = vector.broadcast %247 : vector<1x256xi1> to vector<4x256xi1>
    %249 = vector.broadcast %cst_265 : f32 to vector<4x256xf32>
    %250 = arith.select %248, %246, %249 : vector<4x256xi1>, vector<4x256xf32>
    %c32_266 = arith.constant 32 : index
    %c0_267 = arith.constant 0 : index
    %251 = vector.load %arg13[%c32_266, %c0_267] : memref<36x256xf32, #tpu.memory_space<vmem>>, vector<4x256xf32>
    tpu.vector_store %arg13[%c32_266, %c0_267], %250 {strides = array<i32>} : memref<36x256xf32, #tpu.memory_space<vmem>>, vector<4x256xf32>,
    %c0_268 = arith.constant 0 : index
    %c0_269 = arith.constant 0 : index
    %252 = vector.load %arg5[%c0_268, %c0_269] : memref<4x36xf32, #tpu.memory_space<vmem>>, vector<4x36xf32>
    %c0_270 = arith.constant 0 : index
    %c0_271 = arith.constant 0 : index
    %253 = vector.load %arg13[%c0_270, %c0_271] : memref<36x256xf32, #tpu.memory_space<vmem>>, vector<36x256xf32>
    %cst_272 = arith.constant dense<0.000000e+00> : vector<4x256xf32>
    %254 = tpu.matmul %252, %253, %cst_272 {dimension_numbers = #tpu.dot_dimension_numbers<[1], [0], [0], [1], [0, 0, 1, 1], [], []>} : vector<4x36xf32>, vector<36x256xf32>, vector<4x256xf32> -> vector<4x256xf32>
    %c0_273 = arith.constant 0 : index
    %c0_274 = arith.constant 0 : index
    %255 = vector.load %arg6[%c0_273, %c0_274] : memref<4x1xf32, #tpu.memory_space<vmem>>, vector<4x1xf32>
    %256 = vector.broadcast %255 : vector<4x1xf32> to vector<4x256xf32>
    %257 = arith.addf %254, %256 : vector<4x256xf32>
    %c0_275 = arith.constant 0 : index
    %c0_276 = arith.constant 0 : index
    %258 = vector.load %arg7[%c0_275, %c0_276] : memref<4x4xf32, #tpu.memory_space<vmem>>, vector<4x4xf32>
    %259 = arith.mulf %257, %257 : vector<4x256xf32>
    %cst_277 = arith.constant dense<0.000000e+00> : vector<4x256xf32>
    %260 = tpu.matmul %258, %259, %cst_277 {dimension_numbers = #tpu.dot_dimension_numbers<[1], [0], [0], [1], [0, 0, 1, 1], [], []>} : vector<4x4xf32>, vector<4x256xf32>, vector<4x256xf32> -> vector<4x256xf32>
    %c0_278 = arith.constant 0 : index
    %c0_279 = arith.constant 0 : index
    %261 = vector.load %arg8[%c0_278, %c0_279] : memref<4x1xf32, #tpu.memory_space<vmem>>, vector<4x1xf32>
    %262 = vector.broadcast %261 : vector<4x1xf32> to vector<4x256xf32>
    %263 = arith.addf %260, %262 : vector<4x256xf32>
    %cst_280 = arith.constant 0.000000e+00 : f32
    %264 = vector.broadcast %cst_280 : f32 to vector<4x256xf32>
    %265 = arith.maximumf %263, %264 : vector<4x256xf32>
    %c28_281 = arith.constant 28 : index
    %c17_282 = arith.constant 17 : index
    %266 = vector.load %arg12[%c28_281, %c17_282] : memref<32x290xf32, #tpu.memory_space<vmem>>, vector<4x256xf32>
    %267 = math.sqrt %265 : vector<4x256xf32>
    %268 = arith.mulf %257, %267 : vector<4x256xf32>
    %269 = arith.addf %268, %266 : vector<4x256xf32>
    %c0_283 = arith.constant 0 : index
    %c1_284 = arith.constant 1 : index
    %c1_285 = arith.constant 1 : index
    %c0_286 = arith.constant 0 : index
    %c0_287 = arith.constant 0 : index
    %270 = vector.load %arg9[%c0_283, %c1_284, %c1_285, %c0_286, %c0_287] : memref<1x2x2x4x256xf32, #tpu.memory_space<vmem>>, vector<1x1x1x4x256xf32>
    %271 = vector.shape_cast %270 : vector<1x1x1x4x256xf32> to vector<4x256xf32>
    %272 = vector.shape_cast %269 : vector<4x256xf32> to vector<1x1x1x4x256xf32>
    tpu.vector_store %arg9[%c0_283, %c1_284, %c1_285, %c0_286, %c0_287], %272 {strides = array<i32>} : memref<1x2x2x4x256xf32, #tpu.memory_space<vmem>>, vector<1x1x1x4x256xf32>,
    return
  }
  func.func @transform_0(%arg0: i32) -> (i32, i32, i32) {
    %c0_i32 = arith.constant 0 : i32
    %c0_i32_0 = arith.constant 0 : i32
    %c0_i32_1 = arith.constant 0 : i32
    return %arg0, %c0_i32, %c0_i32_0 : i32, i32, i32
  }
  func.func @transform_1(%arg0: i32) -> (i32, i32) {
    %c0_i32 = arith.constant 0 : i32
    %c0_i32_0 = arith.constant 0 : i32
    %c0_i32_1 = arith.constant 0 : i32
    return %c0_i32, %c0_i32_0 : i32, i32
  }
  func.func @transform_2(%arg0: i32) -> (i32, i32) {
    %c0_i32 = arith.constant 0 : i32
    %c0_i32_0 = arith.constant 0 : i32
    %c0_i32_1 = arith.constant 0 : i32
    return %c0_i32, %c0_i32_0 : i32, i32
  }
  func.func @transform_3(%arg0: i32) -> (i32, i32) {
    %c0_i32 = arith.constant 0 : i32
    %c0_i32_0 = arith.constant 0 : i32
    %c0_i32_1 = arith.constant 0 : i32
    return %c0_i32, %c0_i32_0 : i32, i32
  }
  func.func @transform_4(%arg0: i32) -> (i32, i32) {
    %c0_i32 = arith.constant 0 : i32
    %c0_i32_0 = arith.constant 0 : i32
    %c0_i32_1 = arith.constant 0 : i32
    return %c0_i32, %c0_i32_0 : i32, i32
  }
  func.func @transform_5(%arg0: i32) -> (i32, i32) {
    %c0_i32 = arith.constant 0 : i32
    %c0_i32_0 = arith.constant 0 : i32
    %c0_i32_1 = arith.constant 0 : i32
    return %c0_i32, %c0_i32_0 : i32, i32
  }
  func.func @transform_6(%arg0: i32) -> (i32, i32) {
    %c0_i32 = arith.constant 0 : i32
    %c0_i32_0 = arith.constant 0 : i32
    %c0_i32_1 = arith.constant 0 : i32
    return %c0_i32, %c0_i32_0 : i32, i32
  }
  func.func @transform_7(%arg0: i32) -> (i32, i32) {
    %c0_i32 = arith.constant 0 : i32
    %c0_i32_0 = arith.constant 0 : i32
    %c0_i32_1 = arith.constant 0 : i32
    return %c0_i32, %c0_i32_0 : i32, i32
  }
  func.func @transform_8(%arg0: i32) -> (i32, i32, i32, i32, i32) {
    %c0_i32 = arith.constant 0 : i32
    %c0_i32_0 = arith.constant 0 : i32
    %c0_i32_1 = arith.constant 0 : i32
    %c0_i32_2 = arith.constant 0 : i32
    %c0_i32_3 = arith.constant 0 : i32
    return %arg0, %c0_i32, %c0_i32_0, %c0_i32_1, %c0_i32_2 : i32, i32, i32, i32, i32
  }
}

</mosaic_0001>

<llo_original>
// kernel: _lambda_.1
$region0: #{_lambda_.1}
  #allocation0 [shape = 'u32[]', space=smem, size = 0x4, offset = 0x4, fixed_abs, tag = 'smem constant byte address 0x4 - core index']
  #allocation1 [shape = 'u32[72,128]{1,0:T(1,128)}', space=vmem, size = 0x9000, scoped, tag = 'internal scratch']
  #allocation2 [shape = 'f32[4,290]{1,0:T(4,128)}', space=vmem, size = 0x1800, scoped, tag = 'scratch operand']
  #allocation3 [shape = 'f32[36,256]{1,0:T(8,128)}', space=vmem, size = 0xa000, scoped, tag = 'scratch operand']
  #allocation4 [shape = 'f32[32,290]{1,0:T(8,128)}', space=vmem, size = 0xc000, scoped, tag = 'scratch operand']
  #allocation5 [shape = 'f32[36,256]{1,0:T(8,128)}', space=vmem, size = 0xa000, scoped, tag = 'scratch operand']
  %s0 = inlined_call_operand.vmem [shape: f32[2,4,256], index: 0, kind: input, shape index: {}]
  %s1 = inlined_call_operand.vmem [shape: s32[1,256], index: 1, kind: input, shape index: {}]
  %s2 = inlined_call_operand.vmem [shape: f32[32,36], index: 2, kind: input, shape index: {}]
  %s3 = inlined_call_operand.vmem [shape: f32[32,1], index: 3, kind: input, shape index: {}]
  %s4 = inlined_call_operand.vmem [shape: f32[4,36], index: 4, kind: input, shape index: {}]
  %s5 = inlined_call_operand.vmem [shape: f32[4,1], index: 5, kind: input, shape index: {}]
  %s6 = inlined_call_operand.vmem [shape: f32[4,4], index: 6, kind: input, shape index: {}]
  %s7 = inlined_call_operand.vmem [shape: f32[4,1], index: 7, kind: input, shape index: {}]
  %s8 = inlined_call_operand.vmem [shape: f32[2,2,2,4,256], index: 8, kind: output, shape index: {}]
  %s9 = sld [smem:[#allocation0]]
  $region65: #{_lambda_.1} parent=0
    _
  %s11 = ssub.s32 1, %s9
  %s12 = scalar_select 0, %s11, %s9
  loop: start=0, step=1, limit=4
  $region2: #{_lambda_.1} parent=0 // loop_pre_header
    _
  $region3: #{_lambda_.1} parent=0 // loop_header
    %s14 = sphi 0, %s18
    %p15 = scmp.ge.s32.totalorder %s14, 4
    %s24 = sphi 0, %s26
    %s27 = sphi 0, %s24
    %s28 = sphi 0, %s27
    %s44 = sphi 0, %s28
    %s48 = sphi 0, %s48
    %s50 = sphi 0, %s48
    %s51 = sphi 0, %s50
    %s65 = sphi 0, %s51
    %s69 = sphi 0, %s69
    %s71 = sphi 0, %s69
    %s72 = sphi 0, %s71
    %s86 = sphi 0, %s72
    %s90 = sphi 0, %s90
    %s92 = sphi 0, %s90
    %s93 = sphi 0, %s92
    %s107 = sphi 0, %s93
    %s111 = sphi 0, %s111
    %s113 = sphi 0, %s111
    %s114 = sphi 0, %s113
    %s128 = sphi 0, %s114
    %s132 = sphi 0, %s132
    %s134 = sphi 0, %s132
    %s135 = sphi 0, %s134
    %s149 = sphi 0, %s135
    %s153 = sphi 0, %s153
    %s155 = sphi 0, %s153
    %s156 = sphi 0, %s155
    %s170 = sphi 0, %s156
    %s174 = sphi 0, %s174
    %s176 = sphi 0, %s174
    %s177 = sphi 0, %s176
    %s191 = sphi 0, %s177
    %s197 = sphi 0, %s199
    %s200 = sphi 0, %s197
    %s201 = sphi 0, %s200
    %s217 = sphi 0, %s201
  $region4: #{_lambda_.1} parent=0 // loop_header_branch
    %17 = sbr.rel (%p15) target = $region8
  $region5: #{_lambda_.1} parent=0 // loop_body
    %s19 = ssub.s32 %s14, 1
    %s20 = ssub.s32 %s14, 2
    %s21 = sadd.s32 %s14, 1
    %s22 = ssub.s32 %s14, %s21
    %p23 = scmp.eq.s32.totalorder %s22, 0
    %s25 = sadd.s32 %s24, 1
    %s26 = scalar_select %p23, %s24, %s25
    %p29 = pneg %p23
    %p30 = scmp.eq.s32.totalorder %s14, 1
    %p31 = por %p29, %p30
    %p32 = scmp.ne.s32.totalorder %s24, %s27
    %p33 = scmp.eq.s32.totalorder %s14, 0
    %p34 = por %p32, %p33
    %p35 = scmp.ne.s32.totalorder %s24, %s27
    %p36 = scmp.eq.s32.totalorder %s19, 1
    %p37 = por %p35, %p36
    %p38 = scmp.ne.s32.totalorder %s27, %s28
    %p39 = scmp.eq.s32.totalorder %s19, 0
    %p40 = por %p38, %p39
    %p41 = scmp.ne.s32.totalorder %s27, %s28
    %p42 = scmp.eq.s32.totalorder %s20, 1
    %p43 = por %p41, %p42
    %p45 = scmp.ne.s32.totalorder %s28, %s44
    %p46 = scmp.eq.s32.totalorder %s20, 0
    %p47 = por %p45, %p46
    %s49 = sadd.s32 %s48, 1
    %p52 = scmp.eq.s32.totalorder %s14, 1
    %p53 = scmp.ne.s32.totalorder %s48, %s50
    %p54 = scmp.eq.s32.totalorder %s14, 0
    %p55 = por %p53, %p54
    %p56 = scmp.ne.s32.totalorder %s48, %s50
    %p57 = scmp.eq.s32.totalorder %s19, 1
    %p58 = por %p56, %p57
    %p59 = scmp.ne.s32.totalorder %s50, %s51
    %p60 = scmp.eq.s32.totalorder %s19, 0
    %p61 = por %p59, %p60
    %p62 = scmp.ne.s32.totalorder %s50, %s51
    %p63 = scmp.eq.s32.totalorder %s20, 1
    %p64 = por %p62, %p63
    %p66 = scmp.ne.s32.totalorder %s51, %s65
    %p67 = scmp.eq.s32.totalorder %s20, 0
    %p68 = por %p66, %p67
    %s70 = sadd.s32 %s69, 1
    %p73 = scmp.eq.s32.totalorder %s14, 1
    %p74 = scmp.ne.s32.totalorder %s69, %s71
    %p75 = scmp.eq.s32.totalorder %s14, 0
    %p76 = por %p74, %p75
    %p77 = scmp.ne.s32.totalorder %s69, %s71
    %p78 = scmp.eq.s32.totalorder %s19, 1
    %p79 = por %p77, %p78
    %p80 = scmp.ne.s32.totalorder %s71, %s72
    %p81 = scmp.eq.s32.totalorder %s19, 0
    %p82 = por %p80, %p81
    %p83 = scmp.ne.s32.totalorder %s71, %s72
    %p84 = scmp.eq.s32.totalorder %s20, 1
    %p85 = por %p83, %p84
    %p87 = scmp.ne.s32.totalorder %s72, %s86
    %p88 = scmp.eq.s32.totalorder %s20, 0
    %p89 = por %p87, %p88
    %s91 = sadd.s32 %s90, 1
    %p94 = scmp.eq.s32.totalorder %s14, 1
    %p95 = scmp.ne.s32.totalorder %s90, %s92
    %p96 = scmp.eq.s32.totalorder %s14, 0
    %p97 = por %p95, %p96
    %p98 = scmp.ne.s32.totalorder %s90, %s92
    %p99 = scmp.eq.s32.totalorder %s19, 1
    %p100 = por %p98, %p99
    %p101 = scmp.ne.s32.totalorder %s92, %s93
    %p102 = scmp.eq.s32.totalorder %s19, 0
    %p103 = por %p101, %p102
    %p104 = scmp.ne.s32.totalorder %s92, %s93
    %p105 = scmp.eq.s32.totalorder %s20, 1
    %p106 = por %p104, %p105
    %p108 = scmp.ne.s32.totalorder %s93, %s107
    %p109 = scmp.eq.s32.totalorder %s20, 0
    %p110 = por %p108, %p109
    %s112 = sadd.s32 %s111, 1
    %p115 = scmp.eq.s32.totalorder %s14, 1
    %p116 = scmp.ne.s32.totalorder %s111, %s113
    %p117 = scmp.eq.s32.totalorder %s14, 0
    %p118 = por %p116, %p117
    %p119 = scmp.ne.s32.totalorder %s111, %s113
    %p120 = scmp.eq.s32.totalorder %s19, 1
    %p121 = por %p119, %p120
    %p122 = scmp.ne.s32.totalorder %s113, %s114
    %p123 = scmp.eq.s32.totalorder %s19, 0
    %p124 = por %p122, %p123
    %p125 = scmp.ne.s32.totalorder %s113, %s114
    %p126 = scmp.eq.s32.totalorder %s20, 1
    %p127 = por %p125, %p126
    %p129 = scmp.ne.s32.totalorder %s114, %s128
    %p130 = scmp.eq.s32.totalorder %s20, 0
    %p131 = por %p129, %p130
    %s133 = sadd.s32 %s132, 1
    %p136 = scmp.eq.s32.totalorder %s14, 1
    %p137 = scmp.ne.s32.totalorder %s132, %s134
    %p138 = scmp.eq.s32.totalorder %s14, 0
    %p139 = por %p137, %p138
    %p140 = scmp.ne.s32.totalorder %s132, %s134
    %p141 = scmp.eq.s32.totalorder %s19, 1
    %p142 = por %p140, %p141
    %p143 = scmp.ne.s32.totalorder %s134, %s135
    %p144 = scmp.eq.s32.totalorder %s19, 0
    %p145 = por %p143, %p144
    %p146 = scmp.ne.s32.totalorder %s134, %s135
    %p147 = scmp.eq.s32.totalorder %s20, 1
    %p148 = por %p146, %p147
    %p150 = scmp.ne.s32.totalorder %s135, %s149
    %p151 = scmp.eq.s32.totalorder %s20, 0
    %p152 = por %p150, %p151
    %s154 = sadd.s32 %s153, 1
    %p157 = scmp.eq.s32.totalorder %s14, 1
    %p158 = scmp.ne.s32.totalorder %s153, %s155
    %p159 = scmp.eq.s32.totalorder %s14, 0
    %p160 = por %p158, %p159
    %p161 = scmp.ne.s32.totalorder %s153, %s155
    %p162 = scmp.eq.s32.totalorder %s19, 1
    %p163 = por %p161, %p162
    %p164 = scmp.ne.s32.totalorder %s155, %s156
    %p165 = scmp.eq.s32.totalorder %s19, 0
    %p166 = por %p164, %p165
    %p167 = scmp.ne.s32.totalorder %s155, %s156
    %p168 = scmp.eq.s32.totalorder %s20, 1
    %p169 = por %p167, %p168
    %p171 = scmp.ne.s32.totalorder %s156, %s170
    %p172 = scmp.eq.s32.totalorder %s20, 0
    %p173 = por %p171, %p172
    %s175 = sadd.s32 %s174, 1
    %p178 = scmp.eq.s32.totalorder %s14, 1
    %p179 = scmp.ne.s32.totalorder %s174, %s176
    %p180 = scmp.eq.s32.totalorder %s14, 0
    %p181 = por %p179, %p180
    %p182 = scmp.ne.s32.totalorder %s174, %s176
    %p183 = scmp.eq.s32.totalorder %s19, 1
    %p184 = por %p182, %p183
    %p185 = scmp.ne.s32.totalorder %s176, %s177
    %p186 = scmp.eq.s32.totalorder %s19, 0
    %p187 = por %p185, %p186
    %p188 = scmp.ne.s32.totalorder %s176, %s177
    %p189 = scmp.eq.s32.totalorder %s20, 1
    %p190 = por %p188, %p189
    %p192 = scmp.ne.s32.totalorder %s177, %s191
    %p193 = scmp.eq.s32.totalorder %s20, 0
    %p194 = por %p192, %p193
    %s195 = ssub.s32 %s14, %s21
    %p196 = scmp.eq.s32.totalorder %s195, 0
    %s198 = sadd.s32 %s197, 1
    %s199 = scalar_select %p196, %s197, %s198
    %p202 = pneg %p196
    %p203 = scmp.eq.s32.totalorder %s14, 1
    %p204 = por %p202, %p203
    %p205 = scmp.ne.s32.totalorder %s197, %s200
    %p206 = scmp.eq.s32.totalorder %s14, 0
    %p207 = por %p205, %p206
    %p208 = scmp.ne.s32.totalorder %s197, %s200
    %p209 = scmp.eq.s32.totalorder %s19, 1
    %p210 = por %p208, %p209
    %p211 = scmp.ne.s32.totalorder %s200, %s201
    %p212 = scmp.eq.s32.totalorder %s19, 0
    %p213 = por %p211, %p212
    %p214 = scmp.ne.s32.totalorder %s200, %s201
    %p215 = scmp.eq.s32.totalorder %s20, 1
    %p216 = por %p214, %p215
    %p218 = scmp.ne.s32.totalorder %s201, %s217
    %p219 = scmp.eq.s32.totalorder %s20, 0
    %p220 = por %p218, %p219
    %p221 = scmp.le.s32.totalorder 1, %s14
    %p222 = scmp.lt.s32.totalorder %s14, 3
    %p223 = pnand %p221, %p222
    %p224 = pneg %p223
    // Predicated region
    $region9: #{_lambda_.1} parent=5 // pred_check
      _
    $region10: #{_lambda_.1} parent=5 // pred_check_branch
      %226 = sbr.rel (%p223) target = $region12
    $region11: #{_lambda_.1} parent=5 // pred_region
      %s227 = ssub.s32 %s14, 1
      // Predicated region
      $region13: #{_lambda_.1} parent=11 // pred_check
        %p228 = pneg %p61
      $region14: #{_lambda_.1} parent=11 // pred_check_branch
        %230 = sbr.rel (%p228) target = $region16
      $region15: #{_lambda_.1} parent=11 // pred_region
        _
      $region16: #{_lambda_.1} parent=11 // pred_fallthru
        _
      // Predicated region
      $region17: #{_lambda_.1} parent=11 // pred_check
        %p231 = pneg %p82
      $region18: #{_lambda_.1} parent=11 // pred_check_branch
        %233 = sbr.rel (%p231) target = $region20
      $region19: #{_lambda_.1} parent=11 // pred_region
        _
      $region20: #{_lambda_.1} parent=11 // pred_fallthru
        _
      // Predicated region
      $region21: #{_lambda_.1} parent=11 // pred_check
        %p234 = pneg %p103
      $region22: #{_lambda_.1} parent=11 // pred_check_branch
        %236 = sbr.rel (%p234) target = $region24
      $region23: #{_lambda_.1} parent=11 // pred_region
        _
      $region24: #{_lambda_.1} parent=11 // pred_fallthru
        _
      // Predicated region
      $region25: #{_lambda_.1} parent=11 // pred_check
        %p237 = pneg %p124
      $region26: #{_lambda_.1} parent=11 // pred_check_branch
        %239 = sbr.rel (%p237) target = $region28
      $region27: #{_lambda_.1} parent=11 // pred_region
        _
      $region28: #{_lambda_.1} parent=11 // pred_fallthru
        _
      // Predicated region
      $region29: #{_lambda_.1} parent=11 // pred_check
        %p240 = pneg %p145
      $region30: #{_lambda_.1} parent=11 // pred_check_branch
        %242 = sbr.rel (%p240) target = $region32
      $region31: #{_lambda_.1} parent=11 // pred_region
        _
      $region32: #{_lambda_.1} parent=11 // pred_fallthru
        _
      // Predicated region
      $region33: #{_lambda_.1} parent=11 // pred_check
        %p243 = pneg %p166
      $region34: #{_lambda_.1} parent=11 // pred_check_branch
        %245 = sbr.rel (%p243) target = $region36
      $region35: #{_lambda_.1} parent=11 // pred_region
        _
      $region36: #{_lambda_.1} parent=11 // pred_fallthru
        _
      // Predicated region
      $region37: #{_lambda_.1} parent=11 // pred_check
        %p246 = pneg %p187
      $region38: #{_lambda_.1} parent=11 // pred_check_branch
        %248 = sbr.rel (%p246) target = $region40
      $region39: #{_lambda_.1} parent=11 // pred_region
        _
      $region40: #{_lambda_.1} parent=11 // pred_fallthru
        _
    $region12: #{_lambda_.1} parent=5 // pred_fallthru
      _
    %p249 = scmp.lt.s32.totalorder %s14, 2
    // Predicated region
    $region41: #{_lambda_.1} parent=5 // pred_check
      %p250 = pneg %p249
    $region42: #{_lambda_.1} parent=5 // pred_check_branch
      %252 = sbr.rel (%p250) target = $region44
    $region43: #{_lambda_.1} parent=5 // pred_region
      // Predicated region
      $region45: #{_lambda_.1} parent=43 // pred_check
        %p253 = pneg %p34
      $region46: #{_lambda_.1} parent=43 // pred_check_branch
        %255 = sbr.rel (%p253) target = $region48
      $region47: #{_lambda_.1} parent=43 // pred_region
        %p256 = scmp.lt.s32.totalorder %s14, 1
        %s257 = scalar_select %p256, %s14, 1
        %s258 = smul.addr %s257, 2
        %s259 = smul.addr %s258, 4
        %s260 = scalar_lea.vmem %s0, %s259
      $region48: #{_lambda_.1} parent=43 // pred_fallthru
        _
    $region44: #{_lambda_.1} parent=5 // pred_fallthru
      _
    %p261 = scmp.le.s32.totalorder 1, %s14
    %p262 = scmp.lt.s32.totalorder %s14, 3
    %p263 = pnand %p261, %p262
    %p264 = pneg %p263
    // Predicated region
    $region49: #{_lambda_.1} parent=5 // pred_check
      _
    $region50: #{_lambda_.1} parent=5 // pred_check_branch
      %266 = sbr.rel (%p263) target = $region52
    $region51: #{_lambda_.1} parent=5 // pred_region
      %s267 = ssub.s32 %s14, 1
      %p268 = scmp.lt.s32.totalorder %s19, 1
      %s269 = scalar_select %p268, %s19, 1
      %s270 = smul.addr %s269, 2
      %s271 = smul.addr %s270, 4
      %s272 = scalar_lea.vmem %s0, %s271
      %p273 = pneg %p40
      %p274 = pneg %p37
      %p275 = pneg %p61
      %p276 = pneg %p58
      %p277 = pneg %p82
      %p278 = pneg %p79
      %p279 = pneg %p103
      %p280 = pneg %p100
      %p281 = pneg %p124
      %p282 = pneg %p121
      %p283 = pneg %p145
      %p284 = pneg %p142
      %p285 = pneg %p166
      %p286 = pneg %p163
      %p287 = pneg %p187
      %p288 = pneg %p184
      %p289 = pneg %p213
      %p290 = pneg %p210
      %p291 = scmp.lt.s32.totalorder %s19, 1
      %s292 = scalar_select %p291, %s19, 1
      %s293 = smul.addr %s292, 8
      %s294 = smul.addr %s293, 4
      %s295 = scalar_lea.vmem %s8, %s294
      %p296 = scmp.lt.s32.totalorder %s19, 1
      %s297 = scalar_select %p296, %s19, 1
      %s298 = smul.addr %s297, 2
      %s299 = smul.addr %s298, 4
      %s300 = scalar_lea.vmem %s0, %s299
      %p301 = scmp.lt.s32.totalorder %s19, 1
      %s302 = scalar_select %p301, %s19, 1
      %s303 = smul.addr %s302, 8
      %s304 = smul.addr %s303, 4
      %s305 = scalar_lea.vmem %s8, %s304
      %v306 = vld [vmem:[%s1] sm:$0x3]
      %vm307 = vcmp.ge.s32.totalorder %v306, 1
      %vm308 = vcmp.le.s32.totalorder %v306, 14
      %309 = vst [vmem:[#allocation2] sm:$0xff] 0.0
      %vm310 = vcmask 273408
      %311 = vst.msk [vmem:[#allocation2 + $0x8] sm:$0xf] %vm310, 0.0
      %v312 = vld [vmem:[%s300] sm:$0xff]
      %314 = vrot.lane.b32.xlu0 %v312, 17
      %v315 = vpop.permute.xlu0 %314
      %v316 = vrot.slane %v315, 4
      %vm317 = vcmask 138240
      %v318 = vsel %vm317, %v316, %v315
      %vm321 = vcmask 1043592
      %vm322 = vcmask 1047556
      %vm323 = vmor %vm322, %vm321
      %324 = vst.msk [vmem:[#allocation2] sm:$0xff] %vm323, %v318
      %vm325 = vcmask 134144
      %326 = vst.msk [vmem:[#allocation2 + $0x8] sm:$0xf] %vm325, %v316
      %v327 = vld [vmem:[#allocation2] sm:$0xff]
      %v328 = vsel %vm307, 1, 0
      %v329 = vperm.slane %v328, 0
      %v330 = vperm.slane %v328, 1
      %vm331 = vcmp.eq.s32.totalorder %v329, 1
      %vm332 = vcmp.eq.s32.totalorder %v330, 1
      %334 = vst [vmem:[#allocation1] ss:$2 sm:$0xff] %v327
      %v335 = vld.sshfl [vmem:[#allocation1] sm:$0xff pattern:$0x75316420]
      %v336 = vld.sshfl [vmem:[#allocation1 + $0x8] sm:$0xff pattern:$0x75316420]
      %v339 = vsel %vm331, %v335, 0.0
      %v340 = vsel %vm332, %v336, 0.0
      %341 = vst [vmem:[#allocation3] sm:$0xf] %v339
      %342 = vst [vmem:[#allocation3 + $0x8] sm:$0xf] %v340
      %v343 = vld [vmem:[#allocation2] sm:$0xff]
      %v344 = vld [vmem:[#allocation2 + $0x8] sm:$0xf]
      %s347 = scalar_lea.vmem [#allocation1], 1
      %348 = vst [vmem:[%s347] ss:$2 sm:$0xff] %v343
      %s349 = scalar_lea.vmem [#allocation1], 17
      %350 = vst [vmem:[%s349] ss:$2 sm:$0xff] %v344
      %v351 = vld.sshfl [vmem:[#allocation1] sm:$0xff pattern:$0x75316420]
      %v352 = vld.sshfl [vmem:[#allocation1 + $0x8] sm:$0xff pattern:$0x75316420]
      %v353 = vld.sshfl [vmem:[#allocation1 + $0x10] sm:$0xff pattern:$0x75316420]
      %354 = vrot.lane.b32.xlu0 %v351, 127
      %v355 = vpop.permute.xlu0 %354
      %356 = vrot.lane.b32.xlu0 %v352, 127
      %v357 = vpop.permute.xlu0 %356
      %358 = vrot.lane.b32.xlu0 %v353, 127
      %v359 = vpop.permute.xlu0 %358
      %vm360 = vcmask 1039360
      %v361 = vsel %vm360, %v355, %v357
      %v362 = vsel %vm360, %v357, %v359
      %365 = vst [vmem:[#allocation3] sm:$0xf0] %v361
      %366 = vst [vmem:[#allocation3 + $0x8] sm:$0xf0] %v362
      %v367 = vld [vmem:[#allocation2] sm:$0xff]
      %v368 = vld [vmem:[#allocation2 + $0x8] sm:$0xf]
      %v369 = vsel %vm308, 1, 0
      %v370 = vperm.slane %v369, 0
      %v371 = vperm.slane %v369, 1
      %vm372 = vcmp.eq.s32.totalorder %v370, 1
      %vm373 = vcmp.eq.s32.totalorder %v371, 1
      %376 = vst [vmem:[#allocation1] ss:$2 sm:$0xff] %v367
      %s377 = scalar_lea.vmem [#allocation1], 16
      %378 = vst [vmem:[%s377] ss:$2 sm:$0xff] %v368
      %v379 = vld.sshfl [vmem:[#allocation1] sm:$0xff pattern:$0x75316420]
      %v380 = vld.sshfl [vmem:[#allocation1 + $0x8] sm:$0xff pattern:$0x75316420]
      %v381 = vld.sshfl [vmem:[#allocation1 + $0x10] sm:$0xff pattern:$0x75316420]
      %382 = vrot.lane.b32.xlu0 %v379, 126
      %v383 = vpop.permute.xlu0 %382
      %384 = vrot.lane.b32.xlu0 %v380, 126
      %v385 = vpop.permute.xlu0 %384
      %386 = vrot.lane.b32.xlu0 %v381, 126
      %v387 = vpop.permute.xlu0 %386
      %vm388 = vcmask 1031168
      %v389 = vsel %vm388, %v383, %v385
      %v390 = vsel %vm388, %v385, %v387
      %v393 = vsel %vm372, %v389, 0.0
      %v394 = vsel %vm373, %v390, 0.0
      %395 = vst [vmem:[#allocation3 + $0x10] sm:$0xf] %v393
      %396 = vst [vmem:[#allocation3 + $0x18] sm:$0xf] %v394
      %v397 = vld [vmem:[#allocation2] sm:$0xff]
      %v398 = vld [vmem:[#allocation2 + $0x8] sm:$0xf]
      %401 = vst [vmem:[#allocation1] ss:$2 sm:$0xff] %v397
      %s402 = scalar_lea.vmem [#allocation1], 16
      %403 = vst [vmem:[%s402] ss:$2 sm:$0xff] %v398
      %v404 = vld.sshfl [vmem:[#allocation1] sm:$0xff pattern:$0x75316420]
      %v405 = vld.sshfl [vmem:[#allocation1 + $0x8] sm:$0xff pattern:$0x75316420]
      %v406 = vld.sshfl [vmem:[#allocation1 + $0x10] sm:$0xff pattern:$0x75316420]
      %407 = vrot.lane.b32.xlu0 %v404, 112
      %v408 = vpop.permute.xlu0 %407
      %409 = vrot.lane.b32.xlu0 %v405, 112
      %v410 = vpop.permute.xlu0 %409
      %411 = vrot.lane.b32.xlu0 %v406, 112
      %v412 = vpop.permute.xlu0 %411
      %vm413 = vcmask 916480
      %v414 = vsel %vm413, %v408, %v410
      %v415 = vsel %vm413, %v410, %v412
      %v418 = vsel %vm331, %v414, 0.0
      %v419 = vsel %vm332, %v415, 0.0
      %v422 = vrot.slane %v418, 4
      %v423 = vrot.slane %v419, 4
      %426 = vst [vmem:[#allocation3 + $0x10] sm:$0xf0] %v422
      %427 = vst [vmem:[#allocation3 + $0x18] sm:$0xf0] %v423
      %v428 = vld [vmem:[#allocation2] sm:$0xff]
      %v429 = vld [vmem:[#allocation2 + $0x8] sm:$0xf]
      %432 = vst [vmem:[#allocation1] ss:$2 sm:$0xff] %v428
      %s433 = scalar_lea.vmem [#allocation1], 16
      %434 = vst [vmem:[%s433] ss:$2 sm:$0xff] %v429
      %v435 = vld.sshfl [vmem:[#allocation1] sm:$0xff pattern:$0x75316420]
      %v436 = vld.sshfl [vmem:[#allocation1 + $0x8] sm:$0xff pattern:$0x75316420]
      %v437 = vld.sshfl [vmem:[#allocation1 + $0x10] sm:$0xff pattern:$0x75316420]
      %438 = vrot.lane.b32.xlu0 %v435, 111
      %v439 = vpop.permute.xlu0 %438
      %440 = vrot.lane.b32.xlu0 %v436, 111
      %v441 = vpop.permute.xlu0 %440
      %442 = vrot.lane.b32.xlu0 %v437, 111
      %v443 = vpop.permute.xlu0 %442
      %vm444 = vcmask 908288
      %v445 = vsel %vm444, %v439, %v441
      %v446 = vsel %vm444, %v441, %v443
      %449 = vst [vmem:[#allocation3 + $0x20] sm:$0xf] %v445
      %450 = vst [vmem:[#allocation3 + $0x28] sm:$0xf] %v446
      %v451 = vld [vmem:[#allocation2] sm:$0xff]
      %v452 = vld [vmem:[#allocation2 + $0x8] sm:$0xf]
      %455 = vst [vmem:[#allocation1] ss:$2 sm:$0xff] %v451
      %s456 = scalar_lea.vmem [#allocation1], 16
      %457 = vst [vmem:[%s456] ss:$2 sm:$0xff] %v452
      %v458 = vld.sshfl [vmem:[#allocation1] sm:$0xff pattern:$0x75316420]
      %v459 = vld.sshfl [vmem:[#allocation1 + $0x8] sm:$0xff pattern:$0x75316420]
      %v460 = vld.sshfl [vmem:[#allocation1 + $0x10] sm:$0xff pattern:$0x75316420]
      %461 = vrot.lane.b32.xlu0 %v458, 110
      %v462 = vpop.permute.xlu0 %461
      %463 = vrot.lane.b32.xlu0 %v459, 110
      %v464 = vpop.permute.xlu0 %463
      %465 = vrot.lane.b32.xlu0 %v460, 110
      %v466 = vpop.permute.xlu0 %465
      %vm467 = vcmask 900096
      %v468 = vsel %vm467, %v462, %v464
      %v469 = vsel %vm467, %v464, %v466
      %v472 = vsel %vm372, %v468, 0.0
      %v473 = vsel %vm373, %v469, 0.0
      %v476 = vrot.slane %v472, 4
      %v477 = vrot.slane %v473, 4
      %480 = vst [vmem:[#allocation3 + $0x20] sm:$0xf0] %v476
      %481 = vst [vmem:[#allocation3 + $0x28] sm:$0xf0] %v477
      %v482 = vld [vmem:[#allocation2] sm:$0xff]
      %v483 = vld [vmem:[#allocation2 + $0x8] sm:$0xf]
      %486 = vst [vmem:[#allocation1] ss:$2 sm:$0xff] %v482
      %s487 = scalar_lea.vmem [#allocation1], 16
      %488 = vst [vmem:[%s487] ss:$2 sm:$0xff] %v483
      %v489 = vld.sshfl [vmem:[#allocation1] sm:$0xff pattern:$0x75316420]
      %v490 = vld.sshfl [vmem:[#allocation1 + $0x8] sm:$0xff pattern:$0x75316420]
      %v491 = vld.sshfl [vmem:[#allocation1 + $0x10] sm:$0xff pattern:$0x75316420]
      %492 = vrot.lane.b32.xlu0 %v489, 96
      %v493 = vpop.permute.xlu0 %492
      %494 = vrot.lane.b32.xlu0 %v490, 96
      %v495 = vpop.permute.xlu0 %494
      %496 = vrot.lane.b32.xlu0 %v491, 96
      %v497 = vpop.permute.xlu0 %496
      %vm498 = vcmask 785408
      %v499 = vsel %vm498, %v493, %v495
      %v500 = vsel %vm498, %v495, %v497
      %v503 = vsel %vm331, %v499, 0.0
      %v504 = vsel %vm332, %v500, 0.0
      %505 = vst [vmem:[#allocation3 + $0x30] sm:$0xf] %v503
      %506 = vst [vmem:[#allocation3 + $0x38] sm:$0xf] %v504
      %v507 = vld [vmem:[#allocation2] sm:$0xff]
      %v508 = vld [vmem:[#allocation2 + $0x8] sm:$0xf]
      %s511 = scalar_lea.vmem [#allocation1], 1
      %512 = vst [vmem:[%s511] ss:$2 sm:$0xff] %v507
      %s513 = scalar_lea.vmem [#allocation1], 17
      %514 = vst [vmem:[%s513] ss:$2 sm:$0xff] %v508
      %v515 = vld.sshfl [vmem:[#allocation1] sm:$0xff pattern:$0x75316420]
      %v516 = vld.sshfl [vmem:[#allocation1 + $0x8] sm:$0xff pattern:$0x75316420]
      %v517 = vld.sshfl [vmem:[#allocation1 + $0x10] sm:$0xff pattern:$0x75316420]
      %518 = vrot.lane.b32.xlu0 %v515, 95
      %v519 = vpop.permute.xlu0 %518
      %520 = vrot.lane.b32.xlu0 %v516, 95
      %v521 = vpop.permute.xlu0 %520
      %522 = vrot.lane.b32.xlu0 %v517, 95
      %v523 = vpop.permute.xlu0 %522
      %vm524 = vcmask 777216
      %v525 = vsel %vm524, %v519, %v521
      %v526 = vsel %vm524, %v521, %v523
      %529 = vst [vmem:[#allocation3 + $0x30] sm:$0xf0] %v525
      %530 = vst [vmem:[#allocation3 + $0x38] sm:$0xf0] %v526
      %v531 = vld [vmem:[#allocation2] sm:$0xff]
      %v532 = vld [vmem:[#allocation2 + $0x8] sm:$0xf]
      %535 = vst [vmem:[#allocation1] ss:$2 sm:$0xff] %v531
      %s536 = scalar_lea.vmem [#allocation1], 16
      %537 = vst [vmem:[%s536] ss:$2 sm:$0xff] %v532
      %v538 = vld.sshfl [vmem:[#allocation1] sm:$0xff pattern:$0x75316420]
      %v539 = vld.sshfl [vmem:[#allocation1 + $0x8] sm:$0xff pattern:$0x75316420]
      %v540 = vld.sshfl [vmem:[#allocation1 + $0x10] sm:$0xff pattern:$0x75316420]
      %541 = vrot.lane.b32.xlu0 %v538, 94
      %v542 = vpop.permute.xlu0 %541
      %543 = vrot.lane.b32.xlu0 %v539, 94
      %v544 = vpop.permute.xlu0 %543
      %545 = vrot.lane.b32.xlu0 %v540, 94
      %v546 = vpop.permute.xlu0 %545
      %vm547 = vcmask 769024
      %v548 = vsel %vm547, %v542, %v544
      %v549 = vsel %vm547, %v544, %v546
      %v552 = vsel %vm372, %v548, 0.0
      %v553 = vsel %vm373, %v549, 0.0
      %554 = vst [vmem:[#allocation3 + $0x40] sm:$0xf] %v552
      %555 = vst [vmem:[#allocation3 + $0x48] sm:$0xf] %v553
      %v556 = vld [vmem:[%s2] sm:$0xff]
      %v557 = vld [vmem:[%s2 + $0x8] sm:$0xff]
      %v558 = vld [vmem:[%s2 + $0x10] sm:$0xff]
      %v559 = vld [vmem:[%s2 + $0x18] sm:$0xff]
      %v560 = vld [vmem:[#allocation3] sm:$0xff]
      %v561 = vld [vmem:[#allocation3 + $0x8] sm:$0xff]
      %v562 = vld [vmem:[#allocation3 + $0x10] sm:$0xff]
      %v563 = vld [vmem:[#allocation3 + $0x18] sm:$0xff]
      %v564 = vld [vmem:[#allocation3 + $0x20] sm:$0xff]
      %v565 = vld [vmem:[#allocation3 + $0x28] sm:$0xff]
      %v566 = vld [vmem:[#allocation3 + $0x30] sm:$0xff]
      %v567 = vld [vmem:[#allocation3 + $0x38] sm:$0xff]
      %v568 = vld [vmem:[#allocation3 + $0x40] sm:$0xf]
      %v569 = vld [vmem:[#allocation3 + $0x48] sm:$0xf]
      %v570 = vld [vmem:[%s3] sm:$0xff]
      %v571 = vld [vmem:[%s3 + $0x8] sm:$0xff]
      %v572 = vld [vmem:[%s3 + $0x10] sm:$0xff]
      %v573 = vld [vmem:[%s3 + $0x18] sm:$0xff]
      %575 = vset.pattern.permute.xlu0 0
      %576 = vperm.xlu0 %575, %v570
      %v577 = vpop.permute.xlu0 %576
      %580 = vset.pattern.permute.xlu0 0
      %581 = vperm.xlu0 %580, %v571
      %v582 = vpop.permute.xlu0 %581
      %585 = vset.pattern.permute.xlu0 0
      %586 = vperm.xlu0 %585, %v572
      %v587 = vpop.permute.xlu0 %586
      %590 = vset.pattern.permute.xlu0 0
      %591 = vperm.xlu0 %590, %v573
      %v592 = vpop.permute.xlu0 %591
      %vm594 = vcmask 293888
      %v596 = vsel %vm594, %v556, 0
      %v599 = vsel %vm594, %v557, 0
      %v602 = vsel %vm594, %v558, 0
      %v605 = vsel %vm594, %v559, 0
      %vm607 = vcmask 1043456
      %v609 = vsel %vm607, %v568, 0
      %v612 = vsel %vm607, %v569, 0
      %614 = vmatpush.msra.mxu0 0.0
      %615 = vmatpush.msra.mxu0 0.0
      %616 = vmatpush.msra.mxu0 0.0
      %617 = vmatpush.msra.mxu0 0.0
      %618 = vmatpush.msra.mxu0 0.0
      %619 = vmatpush.msra.mxu0 0.0
      %620 = vmatpush.msra.mxu0 0.0
      %621 = vmatpush.msra.mxu0 0.0
      %622 = vmatpush.msra.mxu0 0.0
      %623 = vmatpush.msra.mxu0 0.0
      %624 = vmatpush.msra.mxu0 0.0
      %625 = vmatpush.msra.mxu0 %v609
      %626 = vmatpush.msra.mxu0 %v566
      %627 = vmatpush.msra.mxu0 %v564
      %628 = vmatpush.msra.mxu0 %v562
      %629 = vmatpush.msra.mxu0 %v560
      %630 = vmatmul.f32.gmra.mxu0 %v596
      %v631 = vpop.f32.mrf.mxu0
      %v632 = vadd.f32 %v577, %v631
      %633 = vmatmul.f32.gmra.mxu0 %v599
      %v634 = vpop.f32.mrf.mxu0
      %v635 = vadd.f32 %v582, %v634
      %636 = vmatmul.f32.gmra.mxu0 %v602
      %v637 = vpop.f32.mrf.mxu0
      %v638 = vadd.f32 %v587, %v637
      %639 = vmatmul.f32.gmra.mxu0 %v605
      %v640 = vpop.f32.mrf.mxu0
      %v641 = vadd.f32 %v592, %v640
      %642 = vdwg.mxu0
      %643 = vmatpush.msra.mxu0 0.0
      %644 = vmatpush.msra.mxu0 0.0
      %645 = vmatpush.msra.mxu0 0.0
      %646 = vmatpush.msra.mxu0 0.0
      %647 = vmatpush.msra.mxu0 0.0
      %648 = vmatpush.msra.mxu0 0.0
      %649 = vmatpush.msra.mxu0 0.0
      %650 = vmatpush.msra.mxu0 0.0
      %651 = vmatpush.msra.mxu0 0.0
      %652 = vmatpush.msra.mxu0 0.0
      %653 = vmatpush.msra.mxu0 0.0
      %654 = vmatpush.msra.mxu0 %v612
      %655 = vmatpush.msra.mxu0 %v567
      %656 = vmatpush.msra.mxu0 %v565
      %657 = vmatpush.msra.mxu0 %v563
      %658 = vmatpush.msra.mxu0 %v561
      %659 = vmatmul.f32.gmra.mxu0 %v596
      %v660 = vpop.f32.mrf.mxu0
      %v661 = vadd.f32 %v577, %v660
      %662 = vmatmul.f32.gmra.mxu0 %v599
      %v663 = vpop.f32.mrf.mxu0
      %v664 = vadd.f32 %v582, %v663
      %665 = vmatmul.f32.gmra.mxu0 %v602
      %v666 = vpop.f32.mrf.mxu0
      %v667 = vadd.f32 %v587, %v666
      %668 = vmatmul.f32.gmra.mxu0 %v605
      %v669 = vpop.f32.mrf.mxu0
      %v670 = vadd.f32 %v592, %v669
      %671 = vdwg.mxu0
      %672 = vst [vmem:[#allocation4] sm:$0xff] 0.0
      %673 = vst [vmem:[#allocation4 + $0x8] sm:$0xff] 0.0
      %vm674 = vcmask 277504
      %675 = vst.msk [vmem:[#allocation4 + $0x10] sm:$0xff] %vm674, 0.0
      %676 = vst [vmem:[#allocation4 + $0x18] sm:$0xff] 0.0
      %677 = vst [vmem:[#allocation4 + $0x20] sm:$0xff] 0.0
      %678 = vst.msk [vmem:[#allocation4 + $0x28] sm:$0xff] %vm674, 0.0
      %679 = vst [vmem:[#allocation4 + $0x30] sm:$0xff] 0.0
      %680 = vst [vmem:[#allocation4 + $0x38] sm:$0xff] 0.0
      %681 = vst.msk [vmem:[#allocation4 + $0x40] sm:$0xff] %vm674, 0.0
      %682 = vst [vmem:[#allocation4 + $0x48] sm:$0xff] 0.0
      %683 = vst [vmem:[#allocation4 + $0x50] sm:$0xff] 0.0
      %684 = vst.msk [vmem:[#allocation4 + $0x58] sm:$0xff] %vm674, 0.0
      %vm685 = vcmp.ge.f32.partialorder %v632, 0.0
      %vm686 = vcmp.ge.f32.partialorder %v661, 0.0
      %vm687 = vcmp.ge.f32.partialorder %v635, 0.0
      %vm688 = vcmp.ge.f32.partialorder %v664, 0.0
      %v689 = vmul.f32 %v632, 0.01
      %v690 = vmul.f32 %v661, 0.01
      %v691 = vmul.f32 %v635, 0.01
      %v692 = vmul.f32 %v664, 0.01
      %v693 = vsel %vm685, %v632, %v689
      %v694 = vsel %vm686, %v661, %v690
      %v695 = vsel %vm687, %v635, %v691
      %v696 = vsel %vm688, %v664, %v692
      %701 = vrot.lane.b32.xlu0 %v693, 17
      %v702 = vpop.permute.xlu0 %701
      %703 = vrot.lane.b32.xlu0 %v694, 17
      %v704 = vpop.permute.xlu0 %703
      %705 = vrot.lane.b32.xlu0 %v695, 17
      %v706 = vpop.permute.xlu0 %705
      %707 = vrot.lane.b32.xlu0 %v696, 17
      %v708 = vpop.permute.xlu0 %707
      %v709 = vsel %vm317, %v702, %v704
      %v710 = vsel %vm317, %v706, %v708
      %vm717 = vcmask 1047688
      %718 = vst.msk [vmem:[#allocation4] sm:$0xff] %vm717, %v702
      %719 = vst [vmem:[#allocation4 + $0x8] sm:$0xff] %v709
      %720 = vst.msk [vmem:[#allocation4 + $0x10] sm:$0xff] %vm317, %v704
      %721 = vst.msk [vmem:[#allocation4 + $0x18] sm:$0xff] %vm717, %v706
      %722 = vst [vmem:[#allocation4 + $0x20] sm:$0xff] %v710
      %723 = vst.msk [vmem:[#allocation4 + $0x28] sm:$0xff] %vm317, %v708
      %728 = vrot.lane.b32.xlu0 %v638, 17
      %v729 = vpop.permute.xlu0 %728
      %730 = vrot.lane.b32.xlu0 %v667, 17
      %v731 = vpop.permute.xlu0 %730
      %732 = vrot.lane.b32.xlu0 %v641, 17
      %v733 = vpop.permute.xlu0 %732
      %734 = vrot.lane.b32.xlu0 %v670, 17
      %v735 = vpop.permute.xlu0 %734
      %v736 = vsel %vm317, %v729, %v731
      %v737 = vsel %vm317, %v733, %v735
      %744 = vst.msk [vmem:[#allocation4 + $0x30] sm:$0xff] %vm717, %v729
      %745 = vst [vmem:[#allocation4 + $0x38] sm:$0xff] %v736
      %746 = vst.msk [vmem:[#allocation4 + $0x40] sm:$0xff] %vm317, %v731
      %747 = vst.msk [vmem:[#allocation4 + $0x48] sm:$0xff] %vm717, %v733
      %748 = vst [vmem:[#allocation4 + $0x50] sm:$0xff] %v737
      %749 = vst.msk [vmem:[#allocation4 + $0x58] sm:$0xff] %vm317, %v735
      %v750 = vld [vmem:[#allocation4 + $0x18] sm:$0xf0]
      %v751 = vld [vmem:[#allocation4 + $0x20] sm:$0xf0]
      %v752 = vsel %vm331, %v750, 0.0
      %v753 = vsel %vm332, %v751, 0.0
      %v756 = vrot.slane %v752, 4
      %v757 = vrot.slane %v753, 4
      %760 = vst [vmem:[#allocation5] sm:$0xf] %v756
      %761 = vst [vmem:[#allocation5 + $0x8] sm:$0xf] %v757
      %v762 = vld [vmem:[#allocation4 + $0x18] sm:$0xf]
      %v763 = vld [vmem:[#allocation4 + $0x20] sm:$0xf]
      %v764 = vld [vmem:[#allocation4 + $0x28] sm:$0xf]
      %v768 = vrot.slane %v762, 4
      %v769 = vrot.slane %v763, 4
      %v770 = vrot.slane %v764, 4
      %771 = vrot.lane.b32.xlu0 %v768, 127
      %v772 = vpop.permute.xlu0 %771
      %773 = vrot.lane.b32.xlu0 %v769, 127
      %v774 = vpop.permute.xlu0 %773
      %775 = vrot.lane.b32.xlu0 %v770, 127
      %v776 = vpop.permute.xlu0 %775
      %v777 = vsel %vm360, %v772, %v774
      %v778 = vsel %vm360, %v774, %v776
      %781 = vst [vmem:[#allocation5] sm:$0xf0] %v777
      %782 = vst [vmem:[#allocation5 + $0x8] sm:$0xf0] %v778
      %v783 = vld [vmem:[#allocation4 + $0x18] sm:$0xf0]
      %v784 = vld [vmem:[#allocation4 + $0x20] sm:$0xf0]
      %v785 = vld [vmem:[#allocation4 + $0x28] sm:$0xf0]
      %v789 = vrot.slane %v783, 4
      %v790 = vrot.slane %v784, 4
      %v791 = vrot.slane %v785, 4
      %792 = vrot.lane.b32.xlu0 %v789, 127
      %v793 = vpop.permute.xlu0 %792
      %794 = vrot.lane.b32.xlu0 %v790, 127
      %v795 = vpop.permute.xlu0 %794
      %796 = vrot.lane.b32.xlu0 %v791, 127
      %v797 = vpop.permute.xlu0 %796
      %v798 = vsel %vm360, %v793, %v795
      %v799 = vsel %vm360, %v795, %v797
      %802 = vst [vmem:[#allocation5 + $0x10] sm:$0xf] %v798
      %803 = vst [vmem:[#allocation5 + $0x18] sm:$0xf] %v799
      %v804 = vld [vmem:[#allocation4] sm:$0xf0]
      %v805 = vld [vmem:[#allocation4 + $0x8] sm:$0xf0]
      %v806 = vld [vmem:[#allocation4 + $0x10] sm:$0xf0]
      %v810 = vrot.slane %v804, 4
      %v811 = vrot.slane %v805, 4
      %v812 = vrot.slane %v806, 4
      %813 = vrot.lane.b32.xlu0 %v810, 112
      %v814 = vpop.permute.xlu0 %813
      %815 = vrot.lane.b32.xlu0 %v811, 112
      %v816 = vpop.permute.xlu0 %815
      %817 = vrot.lane.b32.xlu0 %v812, 112
      %v818 = vpop.permute.xlu0 %817
      %v819 = vsel %vm413, %v814, %v816
      %v820 = vsel %vm413, %v816, %v818
      %v823 = vsel %vm331, %v819, 0.0
      %v824 = vsel %vm332, %v820, 0.0
      %v827 = vrot.slane %v823, 4
      %v828 = vrot.slane %v824, 4
      %831 = vst [vmem:[#allocation5 + $0x10] sm:$0xf0] %v827
      %832 = vst [vmem:[#allocation5 + $0x18] sm:$0xf0] %v828
      %v833 = vld [vmem:[#allocation4] sm:$0xf]
      %v834 = vld [vmem:[#allocation4 + $0x8] sm:$0xf]
      %v835 = vld [vmem:[#allocation4 + $0x10] sm:$0xf]
      %839 = vrot.lane.b32.xlu0 %v833, 111
      %v840 = vpop.permute.xlu0 %839
      %841 = vrot.lane.b32.xlu0 %v834, 111
      %v842 = vpop.permute.xlu0 %841
      %843 = vrot.lane.b32.xlu0 %v835, 111
      %v844 = vpop.permute.xlu0 %843
      %v845 = vsel %vm444, %v840, %v842
      %v846 = vsel %vm444, %v842, %v844
      %849 = vst [vmem:[#allocation5 + $0x20] sm:$0xf] %v845
      %850 = vst [vmem:[#allocation5 + $0x28] sm:$0xf] %v846
      %v851 = vld [vmem:[#allocation4] sm:$0xf0]
      %v852 = vld [vmem:[#allocation4 + $0x8] sm:$0xf0]
      %v853 = vld [vmem:[#allocation4 + $0x10] sm:$0xf0]
      %857 = vrot.lane.b32.xlu0 %v851, 111
      %v858 = vpop.permute.xlu0 %857
      %859 = vrot.lane.b32.xlu0 %v852, 111
      %v860 = vpop.permute.xlu0 %859
      %861 = vrot.lane.b32.xlu0 %v853, 111
      %v862 = vpop.permute.xlu0 %861
      %v863 = vsel %vm444, %v858, %v860
      %v864 = vsel %vm444, %v860, %v862
      %867 = vst [vmem:[#allocation5 + $0x20] sm:$0xf0] %v863
      %868 = vst [vmem:[#allocation5 + $0x28] sm:$0xf0] %v864
      %v869 = vld [vmem:[#allocation4 + $0x18] sm:$0xf0]
      %v870 = vld [vmem:[#allocation4 + $0x20] sm:$0xf0]
      %v871 = vld [vmem:[#allocation4 + $0x28] sm:$0xf0]
      %v875 = vrot.slane %v869, 4
      %v876 = vrot.slane %v870, 4
      %v877 = vrot.slane %v871, 4
      %878 = vrot.lane.b32.xlu0 %v875, 112
      %v879 = vpop.permute.xlu0 %878
      %880 = vrot.lane.b32.xlu0 %v876, 112
      %v881 = vpop.permute.xlu0 %880
      %882 = vrot.lane.b32.xlu0 %v877, 112
      %v883 = vpop.permute.xlu0 %882
      %v884 = vsel %vm413, %v879, %v881
      %v885 = vsel %vm413, %v881, %v883
      %v888 = vsel %vm331, %v884, 0.0
      %v889 = vsel %vm332, %v885, 0.0
      %890 = vst [vmem:[#allocation5 + $0x30] sm:$0xf] %v888
      %891 = vst [vmem:[#allocation5 + $0x38] sm:$0xf] %v889
      %v892 = vld [vmem:[#allocation4 + $0x18] sm:$0xf]
      %v893 = vld [vmem:[#allocation4 + $0x20] sm:$0xf]
      %v894 = vld [vmem:[#allocation4 + $0x28] sm:$0xf]
      %v898 = vrot.slane %v892, 4
      %v899 = vrot.slane %v893, 4
      %v900 = vrot.slane %v894, 4
      %901 = vrot.lane.b32.xlu0 %v898, 111
      %v902 = vpop.permute.xlu0 %901
      %903 = vrot.lane.b32.xlu0 %v899, 111
      %v904 = vpop.permute.xlu0 %903
      %905 = vrot.lane.b32.xlu0 %v900, 111
      %v906 = vpop.permute.xlu0 %905
      %v907 = vsel %vm444, %v902, %v904
      %v908 = vsel %vm444, %v904, %v906
      %911 = vst [vmem:[#allocation5 + $0x30] sm:$0xf0] %v907
      %912 = vst [vmem:[#allocation5 + $0x38] sm:$0xf0] %v908
      %v913 = vld [vmem:[#allocation4 + $0x18] sm:$0xf0]
      %v914 = vld [vmem:[#allocation4 + $0x20] sm:$0xf0]
      %v915 = vld [vmem:[#allocation4 + $0x28] sm:$0xf0]
      %v919 = vrot.slane %v913, 4
      %v920 = vrot.slane %v914, 4
      %v921 = vrot.slane %v915, 4
      %922 = vrot.lane.b32.xlu0 %v919, 111
      %v923 = vpop.permute.xlu0 %922
      %924 = vrot.lane.b32.xlu0 %v920, 111
      %v925 = vpop.permute.xlu0 %924
      %926 = vrot.lane.b32.xlu0 %v921, 111
      %v927 = vpop.permute.xlu0 %926
      %v928 = vsel %vm444, %v923, %v925
      %v929 = vsel %vm444, %v925, %v927
      %932 = vst [vmem:[#allocation5 + $0x40] sm:$0xf] %v928
      %933 = vst [vmem:[#allocation5 + $0x48] sm:$0xf] %v929
      %v934 = vld [vmem:[%s4] sm:$0xf]
      %v935 = vld [vmem:[#allocation5] sm:$0xff]
      %v936 = vld [vmem:[#allocation5 + $0x8] sm:$0xff]
      %v937 = vld [vmem:[#allocation5 + $0x10] sm:$0xff]
      %v938 = vld [vmem:[#allocation5 + $0x18] sm:$0xff]
      %v939 = vld [vmem:[#allocation5 + $0x20] sm:$0xff]
      %v940 = vld [vmem:[#allocation5 + $0x28] sm:$0xff]
      %v941 = vld [vmem:[#allocation5 + $0x30] sm:$0xff]
      %v942 = vld [vmem:[#allocation5 + $0x38] sm:$0xff]
      %v943 = vld [vmem:[#allocation5 + $0x40] sm:$0xf]
      %v944 = vld [vmem:[#allocation5 + $0x48] sm:$0xf]
      %v945 = vld [vmem:[%s5] sm:$0xf]
      %947 = vset.pattern.permute.xlu0 0
      %948 = vperm.xlu0 %947, %v945
      %v949 = vpop.permute.xlu0 %948
      %v952 = vsel %vm594, %v934, 0
      %v955 = vsel %vm607, %v943, 0
      %v958 = vsel %vm607, %v944, 0
      %960 = vmatpush.msra.mxu0 0.0
      %961 = vmatpush.msra.mxu0 0.0
      %962 = vmatpush.msra.mxu0 0.0
      %963 = vmatpush.msra.mxu0 0.0
      %964 = vmatpush.msra.mxu0 0.0
      %965 = vmatpush.msra.mxu0 0.0
      %966 = vmatpush.msra.mxu0 0.0
      %967 = vmatpush.msra.mxu0 0.0
      %968 = vmatpush.msra.mxu0 0.0
      %969 = vmatpush.msra.mxu0 0.0
      %970 = vmatpush.msra.mxu0 0.0
      %971 = vmatpush.msra.mxu0 %v955
      %972 = vmatpush.msra.mxu0 %v941
      %973 = vmatpush.msra.mxu0 %v939
      %974 = vmatpush.msra.mxu0 %v937
      %975 = vmatpush.msra.mxu0 %v935
      %976 = vmatmul.f32.gmra.mxu0 %v952
      %v977 = vpop.f32.mrf.mxu0
      %v978 = vadd.f32 %v949, %v977
      %979 = vdwg.mxu0
      %980 = vmatpush.msra.mxu0 0.0
      %981 = vmatpush.msra.mxu0 0.0
      %982 = vmatpush.msra.mxu0 0.0
      %983 = vmatpush.msra.mxu0 0.0
      %984 = vmatpush.msra.mxu0 0.0
      %985 = vmatpush.msra.mxu0 0.0
      %986 = vmatpush.msra.mxu0 0.0
      %987 = vmatpush.msra.mxu0 0.0
      %988 = vmatpush.msra.mxu0 0.0
      %989 = vmatpush.msra.mxu0 0.0
      %990 = vmatpush.msra.mxu0 0.0
      %991 = vmatpush.msra.mxu0 %v958
      %992 = vmatpush.msra.mxu0 %v942
      %993 = vmatpush.msra.mxu0 %v940
      %994 = vmatpush.msra.mxu0 %v938
      %995 = vmatpush.msra.mxu0 %v936
      %996 = vmatmul.f32.gmra.mxu0 %v952
      %v997 = vpop.f32.mrf.mxu0
      %v998 = vadd.f32 %v949, %v997
      %999 = vdwg.mxu0
      %v1000 = vld [vmem:[%s6] sm:$0xf]
      %v1001 = vmul.f32 %v978, %v978
      %v1002 = vmul.f32 %v998, %v998
      %v1003 = vld [vmem:[%s7] sm:$0xf]
      %1005 = vset.pattern.permute.xlu0 0
      %1006 = vperm.xlu0 %1005, %v1003
      %v1007 = vpop.permute.xlu0 %1006
      %vm1009 = vcmask 31744
      %v1011 = vsel %vm1009, %v1000, 0
      %v1014 = vsel %vm607, %v1001, 0
      %v1017 = vsel %vm607, %v1002, 0
      %1019 = vmatpush.msra.mxu0 0.0
      %1020 = vmatpush.msra.mxu0 0.0
      %1021 = vmatpush.msra.mxu0 0.0
      %1022 = vmatpush.msra.mxu0 0.0
      %1023 = vmatpush.msra.mxu0 0.0
      %1024 = vmatpush.msra.mxu0 0.0
      %1025 = vmatpush.msra.mxu0 0.0
      %1026 = vmatpush.msra.mxu0 0.0
      %1027 = vmatpush.msra.mxu0 0.0
      %1028 = vmatpush.msra.mxu0 0.0
      %1029 = vmatpush.msra.mxu0 0.0
      %1030 = vmatpush.msra.mxu0 0.0
      %1031 = vmatpush.msra.mxu0 0.0
      %1032 = vmatpush.msra.mxu0 0.0
      %1033 = vmatpush.msra.mxu0 0.0
      %1034 = vmatpush.msra.mxu0 %v1014
      %1035 = vmatmul.f32.gmra.mxu0 %v1011
      %v1036 = vpop.f32.mrf.mxu0
      %v1037 = vadd.f32 %v1007, %v1036
      %1038 = vdwg.mxu0
      %1039 = vmatpush.msra.mxu0 0.0
      %1040 = vmatpush.msra.mxu0 0.0
      %1041 = vmatpush.msra.mxu0 0.0
      %1042 = vmatpush.msra.mxu0 0.0
      %1043 = vmatpush.msra.mxu0 0.0
      %1044 = vmatpush.msra.mxu0 0.0
      %1045 = vmatpush.msra.mxu0 0.0
      %1046 = vmatpush.msra.mxu0 0.0
      %1047 = vmatpush.msra.mxu0 0.0
      %1048 = vmatpush.msra.mxu0 0.0
      %1049 = vmatpush.msra.mxu0 0.0
      %1050 = vmatpush.msra.mxu0 0.0
      %1051 = vmatpush.msra.mxu0 0.0
      %1052 = vmatpush.msra.mxu0 0.0
      %1053 = vmatpush.msra.mxu0 0.0
      %1054 = vmatpush.msra.mxu0 %v1017
      %1055 = vmatmul.f32.gmra.mxu0 %v1011
      %v1056 = vpop.f32.mrf.mxu0
      %v1057 = vadd.f32 %v1007, %v1056
      %1058 = vdwg.mxu0
      %v1059 = vmax.f32 %v1037, 0.0
      %v1060 = vmax.f32 %v1057, 0.0
      %v1061 = vld [vmem:[#allocation4 + $0x30] sm:$0xf]
      %v1062 = vld [vmem:[#allocation4 + $0x38] sm:$0xf]
      %v1063 = vld [vmem:[#allocation4 + $0x40] sm:$0xf]
      %v1064 = vrsqrt.pop %v1059
      %v1065 = vmul.f32 %v1064, %v1059
      %v1066 = vmul.f32 %v1065, %v1064
      %v1067 = vmul.f32 0.5, %v1066
      %v1068 = vsub.f32 1.5, %v1067
      %v1069 = vmul.f32 %v1064, %v1068
      %v1070 = vmul.f32 %v1059, %v1069
      %vm1071 = vcmp.eq.f32.partialorder %v1059, inf
      %v1072 = vsel %vm1071, %v1059, %v1070
      %vm1073 = vcmp.eq.f32.partialorder %v1059, 0.0
      %v1074 = vand.u32 %v1059, 2147483648
      %v1075 = vsel %vm1073, %v1074, %v1072
      %v1076 = vrsqrt.pop %v1060
      %v1077 = vmul.f32 %v1076, %v1060
      %v1078 = vmul.f32 %v1077, %v1076
      %v1079 = vmul.f32 0.5, %v1078
      %v1080 = vsub.f32 1.5, %v1079
      %v1081 = vmul.f32 %v1076, %v1080
      %v1082 = vmul.f32 %v1060, %v1081
      %vm1083 = vcmp.eq.f32.partialorder %v1060, inf
      %v1084 = vsel %vm1083, %v1060, %v1082
      %vm1085 = vcmp.eq.f32.partialorder %v1060, 0.0
      %v1086 = vand.u32 %v1060, 2147483648
      %v1087 = vsel %vm1085, %v1086, %v1084
      %v1088 = vmul.f32 %v978, %v1075
      %v1089 = vmul.f32 %v998, %v1087
      %1093 = vrot.lane.b32.xlu0 %v1061, 111
      %v1094 = vpop.permute.xlu0 %1093
      %1095 = vrot.lane.b32.xlu0 %v1062, 111
      %v1096 = vpop.permute.xlu0 %1095
      %1097 = vrot.lane.b32.xlu0 %v1063, 111
      %v1098 = vpop.permute.xlu0 %1097
      %v1099 = vsel %vm444, %v1094, %v1096
      %v1100 = vsel %vm444, %v1096, %v1098
      %v1103 = vadd.f32 %v1088, %v1099
      %v1104 = vadd.f32 %v1089, %v1100
      %v1107 = vrot.slane %v1104, 4
      %v1108 = vsel %vm607, %v1103, %v1107
      %1110 = vst [vmem:[%s305] sm:$0xff] %v1108
      %v1111 = vld [vmem:[#allocation4 + $0x18] sm:$0xf]
      %v1112 = vld [vmem:[#allocation4 + $0x20] sm:$0xf]
      %v1113 = vld [vmem:[#allocation4 + $0x28] sm:$0xf]
      %1117 = vrot.lane.b32.xlu0 %v1111, 127
      %v1118 = vpop.permute.xlu0 %1117
      %1119 = vrot.lane.b32.xlu0 %v1112, 127
      %v1120 = vpop.permute.xlu0 %1119
      %1121 = vrot.lane.b32.xlu0 %v1113, 127
      %v1122 = vpop.permute.xlu0 %1121
      %v1123 = vsel %vm360, %v1118, %v1120
      %v1124 = vsel %vm360, %v1120, %v1122
      %1127 = vst [vmem:[#allocation5] sm:$0xf] %v1123
      %1128 = vst [vmem:[#allocation5 + $0x8] sm:$0xf] %v1124
      %v1129 = vld [vmem:[#allocation4 + $0x18] sm:$0xf0]
      %v1130 = vld [vmem:[#allocation4 + $0x20] sm:$0xf0]
      %v1131 = vld [vmem:[#allocation4 + $0x28] sm:$0xf0]
      %1135 = vrot.lane.b32.xlu0 %v1129, 127
      %v1136 = vpop.permute.xlu0 %1135
      %1137 = vrot.lane.b32.xlu0 %v1130, 127
      %v1138 = vpop.permute.xlu0 %1137
      %1139 = vrot.lane.b32.xlu0 %v1131, 127
      %v1140 = vpop.permute.xlu0 %1139
      %v1141 = vsel %vm360, %v1136, %v1138
      %v1142 = vsel %vm360, %v1138, %v1140
      %1145 = vst [vmem:[#allocation5] sm:$0xf0] %v1141
      %1146 = vst [vmem:[#allocation5 + $0x8] sm:$0xf0] %v1142
      %v1147 = vld [vmem:[#allocation4 + $0x18] sm:$0xf]
      %v1148 = vld [vmem:[#allocation4 + $0x20] sm:$0xf]
      %v1149 = vld [vmem:[#allocation4 + $0x28] sm:$0xf]
      %1153 = vrot.lane.b32.xlu0 %v1147, 126
      %v1154 = vpop.permute.xlu0 %1153
      %1155 = vrot.lane.b32.xlu0 %v1148, 126
      %v1156 = vpop.permute.xlu0 %1155
      %1157 = vrot.lane.b32.xlu0 %v1149, 126
      %v1158 = vpop.permute.xlu0 %1157
      %v1159 = vsel %vm388, %v1154, %v1156
      %v1160 = vsel %vm388, %v1156, %v1158
      %v1163 = vsel %vm372, %v1159, 0.0
      %v1164 = vsel %vm373, %v1160, 0.0
      %1165 = vst [vmem:[#allocation5 + $0x10] sm:$0xf] %v1163
      %1166 = vst [vmem:[#allocation5 + $0x18] sm:$0xf] %v1164
      %v1167 = vld [vmem:[#allocation4] sm:$0xf]
      %v1168 = vld [vmem:[#allocation4 + $0x8] sm:$0xf]
      %v1169 = vld [vmem:[#allocation4 + $0x10] sm:$0xf]
      %v1173 = vrot.slane %v1167, 4
      %v1174 = vrot.slane %v1168, 4
      %v1175 = vrot.slane %v1169, 4
      %1176 = vrot.lane.b32.xlu0 %v1173, 111
      %v1177 = vpop.permute.xlu0 %1176
      %1178 = vrot.lane.b32.xlu0 %v1174, 111
      %v1179 = vpop.permute.xlu0 %1178
      %1180 = vrot.lane.b32.xlu0 %v1175, 111
      %v1181 = vpop.permute.xlu0 %1180
      %v1182 = vsel %vm444, %v1177, %v1179
      %v1183 = vsel %vm444, %v1179, %v1181
      %1186 = vst [vmem:[#allocation5 + $0x10] sm:$0xf0] %v1182
      %1187 = vst [vmem:[#allocation5 + $0x18] sm:$0xf0] %v1183
      %v1188 = vld [vmem:[#allocation4] sm:$0xf0]
      %v1189 = vld [vmem:[#allocation4 + $0x8] sm:$0xf0]
      %v1190 = vld [vmem:[#allocation4 + $0x10] sm:$0xf0]
      %v1194 = vrot.slane %v1188, 4
      %v1195 = vrot.slane %v1189, 4
      %v1196 = vrot.slane %v1190, 4
      %1197 = vrot.lane.b32.xlu0 %v1194, 111
      %v1198 = vpop.permute.xlu0 %1197
      %1199 = vrot.lane.b32.xlu0 %v1195, 111
      %v1200 = vpop.permute.xlu0 %1199
      %1201 = vrot.lane.b32.xlu0 %v1196, 111
      %v1202 = vpop.permute.xlu0 %1201
      %v1203 = vsel %vm444, %v1198, %v1200
      %v1204 = vsel %vm444, %v1200, %v1202
      %1207 = vst [vmem:[#allocation5 + $0x20] sm:$0xf] %v1203
      %1208 = vst [vmem:[#allocation5 + $0x28] sm:$0xf] %v1204
      %v1209 = vld [vmem:[#allocation4] sm:$0xf]
      %v1210 = vld [vmem:[#allocation4 + $0x8] sm:$0xf]
      %v1211 = vld [vmem:[#allocation4 + $0x10] sm:$0xf]
      %1215 = vrot.lane.b32.xlu0 %v1209, 110
      %v1216 = vpop.permute.xlu0 %1215
      %1217 = vrot.lane.b32.xlu0 %v1210, 110
      %v1218 = vpop.permute.xlu0 %1217
      %1219 = vrot.lane.b32.xlu0 %v1211, 110
      %v1220 = vpop.permute.xlu0 %1219
      %v1221 = vsel %vm467, %v1216, %v1218
      %v1222 = vsel %vm467, %v1218, %v1220
      %v1225 = vsel %vm372, %v1221, 0.0
      %v1226 = vsel %vm373, %v1222, 0.0
      %v1229 = vrot.slane %v1225, 4
      %v1230 = vrot.slane %v1226, 4
      %1233 = vst [vmem:[#allocation5 + $0x20] sm:$0xf0] %v1229
      %1234 = vst [vmem:[#allocation5 + $0x28] sm:$0xf0] %v1230
      %v1235 = vld [vmem:[#allocation4 + $0x18] sm:$0xf]
      %v1236 = vld [vmem:[#allocation4 + $0x20] sm:$0xf]
      %v1237 = vld [vmem:[#allocation4 + $0x28] sm:$0xf]
      %1241 = vrot.lane.b32.xlu0 %v1235, 111
      %v1242 = vpop.permute.xlu0 %1241
      %1243 = vrot.lane.b32.xlu0 %v1236, 111
      %v1244 = vpop.permute.xlu0 %1243
      %1245 = vrot.lane.b32.xlu0 %v1237, 111
      %v1246 = vpop.permute.xlu0 %1245
      %v1247 = vsel %vm444, %v1242, %v1244
      %v1248 = vsel %vm444, %v1244, %v1246
      %1251 = vst [vmem:[#allocation5 + $0x30] sm:$0xf] %v1247
      %1252 = vst [vmem:[#allocation5 + $0x38] sm:$0xf] %v1248
      %v1253 = vld [vmem:[#allocation4 + $0x18] sm:$0xf0]
      %v1254 = vld [vmem:[#allocation4 + $0x20] sm:$0xf0]
      %v1255 = vld [vmem:[#allocation4 + $0x28] sm:$0xf0]
      %1259 = vrot.lane.b32.xlu0 %v1253, 111
      %v1260 = vpop.permute.xlu0 %1259
      %1261 = vrot.lane.b32.xlu0 %v1254, 111
      %v1262 = vpop.permute.xlu0 %1261
      %1263 = vrot.lane.b32.xlu0 %v1255, 111
      %v1264 = vpop.permute.xlu0 %1263
      %v1265 = vsel %vm444, %v1260, %v1262
      %v1266 = vsel %vm444, %v1262, %v1264
      %1269 = vst [vmem:[#allocation5 + $0x30] sm:$0xf0] %v1265
      %1270 = vst [vmem:[#allocation5 + $0x38] sm:$0xf0] %v1266
      %v1271 = vld [vmem:[#allocation4 + $0x18] sm:$0xf]
      %v1272 = vld [vmem:[#allocation4 + $0x20] sm:$0xf]
      %v1273 = vld [vmem:[#allocation4 + $0x28] sm:$0xf]
      %1277 = vrot.lane.b32.xlu0 %v1271, 110
      %v1278 = vpop.permute.xlu0 %1277
      %1279 = vrot.lane.b32.xlu0 %v1272, 110
      %v1280 = vpop.permute.xlu0 %1279
      %1281 = vrot.lane.b32.xlu0 %v1273, 110
      %v1282 = vpop.permute.xlu0 %1281
      %v1283 = vsel %vm467, %v1278, %v1280
      %v1284 = vsel %vm467, %v1280, %v1282
      %v1287 = vsel %vm372, %v1283, 0.0
      %v1288 = vsel %vm373, %v1284, 0.0
      %1289 = vst [vmem:[#allocation5 + $0x40] sm:$0xf] %v1287
      %1290 = vst [vmem:[#allocation5 + $0x48] sm:$0xf] %v1288
      %v1291 = vld [vmem:[%s4] sm:$0xf]
      %v1292 = vld [vmem:[#allocation5] sm:$0xff]
      %v1293 = vld [vmem:[#allocation5 + $0x8] sm:$0xff]
      %v1294 = vld [vmem:[#allocation5 + $0x10] sm:$0xff]
      %v1295 = vld [vmem:[#allocation5 + $0x18] sm:$0xff]
      %v1296 = vld [vmem:[#allocation5 + $0x20] sm:$0xff]
      %v1297 = vld [vmem:[#allocation5 + $0x28] sm:$0xff]
      %v1298 = vld [vmem:[#allocation5 + $0x30] sm:$0xff]
      %v1299 = vld [vmem:[#allocation5 + $0x38] sm:$0xff]
      %v1300 = vld [vmem:[#allocation5 + $0x40] sm:$0xf]
      %v1301 = vld [vmem:[#allocation5 + $0x48] sm:$0xf]
      %v1302 = vld [vmem:[%s5] sm:$0xf]
      %1304 = vset.pattern.permute.xlu0 0
      %1305 = vperm.xlu0 %1304, %v1302
      %v1306 = vpop.permute.xlu0 %1305
      %v1309 = vsel %vm594, %v1291, 0
      %v1312 = vsel %vm607, %v1300, 0
      %v1315 = vsel %vm607, %v1301, 0
      %1317 = vmatpush.msra.mxu0 0.0
      %1318 = vmatpush.msra.mxu0 0.0
      %1319 = vmatpush.msra.mxu0 0.0
      %1320 = vmatpush.msra.mxu0 0.0
      %1321 = vmatpush.msra.mxu0 0.0
      %1322 = vmatpush.msra.mxu0 0.0
      %1323 = vmatpush.msra.mxu0 0.0
      %1324 = vmatpush.msra.mxu0 0.0
      %1325 = vmatpush.msra.mxu0 0.0
      %1326 = vmatpush.msra.mxu0 0.0
      %1327 = vmatpush.msra.mxu0 0.0
      %1328 = vmatpush.msra.mxu0 %v1312
      %1329 = vmatpush.msra.mxu0 %v1298
      %1330 = vmatpush.msra.mxu0 %v1296
      %1331 = vmatpush.msra.mxu0 %v1294
      %1332 = vmatpush.msra.mxu0 %v1292
      %1333 = vmatmul.f32.gmra.mxu0 %v1309
      %v1334 = vpop.f32.mrf.mxu0
      %v1335 = vadd.f32 %v1306, %v1334
      %1336 = vdwg.mxu0
      %1337 = vmatpush.msra.mxu0 0.0
      %1338 = vmatpush.msra.mxu0 0.0
      %1339 = vmatpush.msra.mxu0 0.0
      %1340 = vmatpush.msra.mxu0 0.0
      %1341 = vmatpush.msra.mxu0 0.0
      %1342 = vmatpush.msra.mxu0 0.0
      %1343 = vmatpush.msra.mxu0 0.0
      %1344 = vmatpush.msra.mxu0 0.0
      %1345 = vmatpush.msra.mxu0 0.0
      %1346 = vmatpush.msra.mxu0 0.0
      %1347 = vmatpush.msra.mxu0 0.0
      %1348 = vmatpush.msra.mxu0 %v1315
      %1349 = vmatpush.msra.mxu0 %v1299
      %1350 = vmatpush.msra.mxu0 %v1297
      %1351 = vmatpush.msra.mxu0 %v1295
      %1352 = vmatpush.msra.mxu0 %v1293
      %1353 = vmatmul.f32.gmra.mxu0 %v1309
      %v1354 = vpop.f32.mrf.mxu0
      %v1355 = vadd.f32 %v1306, %v1354
      %1356 = vdwg.mxu0
      %v1357 = vld [vmem:[%s6] sm:$0xf]
      %v1358 = vmul.f32 %v1335, %v1335
      %v1359 = vmul.f32 %v1355, %v1355
      %v1360 = vld [vmem:[%s7] sm:$0xf]
      %1362 = vset.pattern.permute.xlu0 0
      %1363 = vperm.xlu0 %1362, %v1360
      %v1364 = vpop.permute.xlu0 %1363
      %v1367 = vsel %vm1009, %v1357, 0
      %v1370 = vsel %vm607, %v1358, 0
      %v1373 = vsel %vm607, %v1359, 0
      %1375 = vmatpush.msra.mxu0 0.0
      %1376 = vmatpush.msra.mxu0 0.0
      %1377 = vmatpush.msra.mxu0 0.0
      %1378 = vmatpush.msra.mxu0 0.0
      %1379 = vmatpush.msra.mxu0 0.0
      %1380 = vmatpush.msra.mxu0 0.0
      %1381 = vmatpush.msra.mxu0 0.0
      %1382 = vmatpush.msra.mxu0 0.0
      %1383 = vmatpush.msra.mxu0 0.0
      %1384 = vmatpush.msra.mxu0 0.0
      %1385 = vmatpush.msra.mxu0 0.0
      %1386 = vmatpush.msra.mxu0 0.0
      %1387 = vmatpush.msra.mxu0 0.0
      %1388 = vmatpush.msra.mxu0 0.0
      %1389 = vmatpush.msra.mxu0 0.0
      %1390 = vmatpush.msra.mxu0 %v1370
      %1391 = vmatmul.f32.gmra.mxu0 %v1367
      %v1392 = vpop.f32.mrf.mxu0
      %v1393 = vadd.f32 %v1364, %v1392
      %1394 = vdwg.mxu0
      %1395 = vmatpush.msra.mxu0 0.0
      %1396 = vmatpush.msra.mxu0 0.0
      %1397 = vmatpush.msra.mxu0 0.0
      %1398 = vmatpush.msra.mxu0 0.0
      %1399 = vmatpush.msra.mxu0 0.0
      %1400 = vmatpush.msra.mxu0 0.0
      %1401 = vmatpush.msra.mxu0 0.0
      %1402 = vmatpush.msra.mxu0 0.0
      %1403 = vmatpush.msra.mxu0 0.0
      %1404 = vmatpush.msra.mxu0 0.0
      %1405 = vmatpush.msra.mxu0 0.0
      %1406 = vmatpush.msra.mxu0 0.0
      %1407 = vmatpush.msra.mxu0 0.0
      %1408 = vmatpush.msra.mxu0 0.0
      %1409 = vmatpush.msra.mxu0 0.0
      %1410 = vmatpush.msra.mxu0 %v1373
      %1411 = vmatmul.f32.gmra.mxu0 %v1367
      %v1412 = vpop.f32.mrf.mxu0
      %v1413 = vadd.f32 %v1364, %v1412
      %1414 = vdwg.mxu0
      %v1415 = vmax.f32 %v1393, 0.0
      %v1416 = vmax.f32 %v1413, 0.0
      %v1417 = vld [vmem:[#allocation4 + $0x30] sm:$0xf0]
      %v1418 = vld [vmem:[#allocation4 + $0x38] sm:$0xf0]
      %v1419 = vld [vmem:[#allocation4 + $0x40] sm:$0xf0]
      %v1420 = vrsqrt.pop %v1415
      %v1421 = vmul.f32 %v1420, %v1415
      %v1422 = vmul.f32 %v1421, %v1420
      %v1423 = vmul.f32 0.5, %v1422
      %v1424 = vsub.f32 1.5, %v1423
      %v1425 = vmul.f32 %v1420, %v1424
      %v1426 = vmul.f32 %v1415, %v1425
      %vm1427 = vcmp.eq.f32.partialorder %v1415, inf
      %v1428 = vsel %vm1427, %v1415, %v1426
      %vm1429 = vcmp.eq.f32.partialorder %v1415, 0.0
      %v1430 = vand.u32 %v1415, 2147483648
      %v1431 = vsel %vm1429, %v1430, %v1428
      %v1432 = vrsqrt.pop %v1416
      %v1433 = vmul.f32 %v1432, %v1416
      %v1434 = vmul.f32 %v1433, %v1432
      %v1435 = vmul.f32 0.5, %v1434
      %v1436 = vsub.f32 1.5, %v1435
      %v1437 = vmul.f32 %v1432, %v1436
      %v1438 = vmul.f32 %v1416, %v1437
      %vm1439 = vcmp.eq.f32.partialorder %v1416, inf
      %v1440 = vsel %vm1439, %v1416, %v1438
      %vm1441 = vcmp.eq.f32.partialorder %v1416, 0.0
      %v1442 = vand.u32 %v1416, 2147483648
      %v1443 = vsel %vm1441, %v1442, %v1440
      %v1444 = vmul.f32 %v1335, %v1431
      %v1445 = vmul.f32 %v1355, %v1443
      %v1449 = vrot.slane %v1417, 4
      %v1450 = vrot.slane %v1418, 4
      %v1451 = vrot.slane %v1419, 4
      %1452 = vrot.lane.b32.xlu0 %v1449, 111
      %v1453 = vpop.permute.xlu0 %1452
      %1454 = vrot.lane.b32.xlu0 %v1450, 111
      %v1455 = vpop.permute.xlu0 %1454
      %1456 = vrot.lane.b32.xlu0 %v1451, 111
      %v1457 = vpop.permute.xlu0 %1456
      %v1458 = vsel %vm444, %v1453, %v1455
      %v1459 = vsel %vm444, %v1455, %v1457
      %v1462 = vadd.f32 %v1444, %v1458
      %v1463 = vadd.f32 %v1445, %v1459
      %v1466 = vrot.slane %v1463, 4
      %v1467 = vsel %vm607, %v1462, %v1466
      %s1469 = scalar_lea.vmem %s305, 8
      %1470 = vst [vmem:[%s1469] sm:$0xff] %v1467
      %v1471 = vld [vmem:[#allocation4] sm:$0xf0]
      %v1472 = vld [vmem:[#allocation4 + $0x8] sm:$0xf0]
      %v1473 = vld [vmem:[#allocation4 + $0x10] sm:$0xf0]
      %v1477 = vrot.slane %v1471, 4
      %v1478 = vrot.slane %v1472, 4
      %v1479 = vrot.slane %v1473, 4
      %1480 = vrot.lane.b32.xlu0 %v1477, 112
      %v1481 = vpop.permute.xlu0 %1480
      %1482 = vrot.lane.b32.xlu0 %v1478, 112
      %v1483 = vpop.permute.xlu0 %1482
      %1484 = vrot.lane.b32.xlu0 %v1479, 112
      %v1485 = vpop.permute.xlu0 %1484
      %v1486 = vsel %vm413, %v1481, %v1483
      %v1487 = vsel %vm413, %v1483, %v1485
      %v1490 = vsel %vm331, %v1486, 0.0
      %v1491 = vsel %vm332, %v1487, 0.0
      %1492 = vst [vmem:[#allocation5] sm:$0xf] %v1490
      %1493 = vst [vmem:[#allocation5 + $0x8] sm:$0xf] %v1491
      %v1494 = vld [vmem:[#allocation4] sm:$0xf]
      %v1495 = vld [vmem:[#allocation4 + $0x8] sm:$0xf]
      %v1496 = vld [vmem:[#allocation4 + $0x10] sm:$0xf]
      %v1500 = vrot.slane %v1494, 4
      %v1501 = vrot.slane %v1495, 4
      %v1502 = vrot.slane %v1496, 4
      %1503 = vrot.lane.b32.xlu0 %v1500, 111
      %v1504 = vpop.permute.xlu0 %1503
      %1505 = vrot.lane.b32.xlu0 %v1501, 111
      %v1506 = vpop.permute.xlu0 %1505
      %1507 = vrot.lane.b32.xlu0 %v1502, 111
      %v1508 = vpop.permute.xlu0 %1507
      %v1509 = vsel %vm444, %v1504, %v1506
      %v1510 = vsel %vm444, %v1506, %v1508
      %1513 = vst [vmem:[#allocation5] sm:$0xf0] %v1509
      %1514 = vst [vmem:[#allocation5 + $0x8] sm:$0xf0] %v1510
      %v1515 = vld [vmem:[#allocation4] sm:$0xf0]
      %v1516 = vld [vmem:[#allocation4 + $0x8] sm:$0xf0]
      %v1517 = vld [vmem:[#allocation4 + $0x10] sm:$0xf0]
      %v1521 = vrot.slane %v1515, 4
      %v1522 = vrot.slane %v1516, 4
      %v1523 = vrot.slane %v1517, 4
      %1524 = vrot.lane.b32.xlu0 %v1521, 111
      %v1525 = vpop.permute.xlu0 %1524
      %1526 = vrot.lane.b32.xlu0 %v1522, 111
      %v1527 = vpop.permute.xlu0 %1526
      %1528 = vrot.lane.b32.xlu0 %v1523, 111
      %v1529 = vpop.permute.xlu0 %1528
      %v1530 = vsel %vm444, %v1525, %v1527
      %v1531 = vsel %vm444, %v1527, %v1529
      %1534 = vst [vmem:[#allocation5 + $0x10] sm:$0xf] %v1530
      %1535 = vst [vmem:[#allocation5 + $0x18] sm:$0xf] %v1531
      %v1536 = vld [vmem:[#allocation4 + $0x18] sm:$0xf0]
      %v1537 = vld [vmem:[#allocation4 + $0x20] sm:$0xf0]
      %v1538 = vld [vmem:[#allocation4 + $0x28] sm:$0xf0]
      %v1542 = vrot.slane %v1536, 4
      %v1543 = vrot.slane %v1537, 4
      %v1544 = vrot.slane %v1538, 4
      %1545 = vrot.lane.b32.xlu0 %v1542, 112
      %v1546 = vpop.permute.xlu0 %1545
      %1547 = vrot.lane.b32.xlu0 %v1543, 112
      %v1548 = vpop.permute.xlu0 %1547
      %1549 = vrot.lane.b32.xlu0 %v1544, 112
      %v1550 = vpop.permute.xlu0 %1549
      %v1551 = vsel %vm413, %v1546, %v1548
      %v1552 = vsel %vm413, %v1548, %v1550
      %v1555 = vsel %vm331, %v1551, 0.0
      %v1556 = vsel %vm332, %v1552, 0.0
      %v1559 = vrot.slane %v1555, 4
      %v1560 = vrot.slane %v1556, 4
      %1563 = vst [vmem:[#allocation5 + $0x10] sm:$0xf0] %v1559
      %1564 = vst [vmem:[#allocation5 + $0x18] sm:$0xf0] %v1560
      %v1565 = vld [vmem:[#allocation4 + $0x18] sm:$0xf]
      %v1566 = vld [vmem:[#allocation4 + $0x20] sm:$0xf]
      %v1567 = vld [vmem:[#allocation4 + $0x28] sm:$0xf]
      %1571 = vrot.lane.b32.xlu0 %v1565, 111
      %v1572 = vpop.permute.xlu0 %1571
      %1573 = vrot.lane.b32.xlu0 %v1566, 111
      %v1574 = vpop.permute.xlu0 %1573
      %1575 = vrot.lane.b32.xlu0 %v1567, 111
      %v1576 = vpop.permute.xlu0 %1575
      %v1577 = vsel %vm444, %v1572, %v1574
      %v1578 = vsel %vm444, %v1574, %v1576
      %1581 = vst [vmem:[#allocation5 + $0x20] sm:$0xf] %v1577
      %1582 = vst [vmem:[#allocation5 + $0x28] sm:$0xf] %v1578
      %v1583 = vld [vmem:[#allocation4 + $0x18] sm:$0xf0]
      %v1584 = vld [vmem:[#allocation4 + $0x20] sm:$0xf0]
      %v1585 = vld [vmem:[#allocation4 + $0x28] sm:$0xf0]
      %1589 = vrot.lane.b32.xlu0 %v1583, 111
      %v1590 = vpop.permute.xlu0 %1589
      %1591 = vrot.lane.b32.xlu0 %v1584, 111
      %v1592 = vpop.permute.xlu0 %1591
      %1593 = vrot.lane.b32.xlu0 %v1585, 111
      %v1594 = vpop.permute.xlu0 %1593
      %v1595 = vsel %vm444, %v1590, %v1592
      %v1596 = vsel %vm444, %v1592, %v1594
      %1599 = vst [vmem:[#allocation5 + $0x20] sm:$0xf0] %v1595
      %1600 = vst [vmem:[#allocation5 + $0x28] sm:$0xf0] %v1596
      %v1601 = vld [vmem:[#allocation4] sm:$0xf0]
      %v1602 = vld [vmem:[#allocation4 + $0x8] sm:$0xf0]
      %v1603 = vld [vmem:[#allocation4 + $0x10] sm:$0xf0]
      %v1607 = vrot.slane %v1601, 4
      %v1608 = vrot.slane %v1602, 4
      %v1609 = vrot.slane %v1603, 4
      %1610 = vrot.lane.b32.xlu0 %v1607, 96
      %v1611 = vpop.permute.xlu0 %1610
      %1612 = vrot.lane.b32.xlu0 %v1608, 96
      %v1613 = vpop.permute.xlu0 %1612
      %1614 = vrot.lane.b32.xlu0 %v1609, 96
      %v1615 = vpop.permute.xlu0 %1614
      %v1616 = vsel %vm498, %v1611, %v1613
      %v1617 = vsel %vm498, %v1613, %v1615
      %v1620 = vsel %vm331, %v1616, 0.0
      %v1621 = vsel %vm332, %v1617, 0.0
      %1622 = vst [vmem:[#allocation5 + $0x30] sm:$0xf] %v1620
      %1623 = vst [vmem:[#allocation5 + $0x38] sm:$0xf] %v1621
      %v1624 = vld [vmem:[#allocation4] sm:$0xf]
      %v1625 = vld [vmem:[#allocation4 + $0x8] sm:$0xf]
      %v1626 = vld [vmem:[#allocation4 + $0x10] sm:$0xf]
      %v1630 = vrot.slane %v1624, 4
      %v1631 = vrot.slane %v1625, 4
      %v1632 = vrot.slane %v1626, 4
      %1633 = vrot.lane.b32.xlu0 %v1630, 95
      %v1634 = vpop.permute.xlu0 %1633
      %1635 = vrot.lane.b32.xlu0 %v1631, 95
      %v1636 = vpop.permute.xlu0 %1635
      %1637 = vrot.lane.b32.xlu0 %v1632, 95
      %v1638 = vpop.permute.xlu0 %1637
      %v1639 = vsel %vm524, %v1634, %v1636
      %v1640 = vsel %vm524, %v1636, %v1638
      %1643 = vst [vmem:[#allocation5 + $0x30] sm:$0xf0] %v1639
      %1644 = vst [vmem:[#allocation5 + $0x38] sm:$0xf0] %v1640
      %v1645 = vld [vmem:[#allocation4] sm:$0xf0]
      %v1646 = vld [vmem:[#allocation4 + $0x8] sm:$0xf0]
      %v1647 = vld [vmem:[#allocation4 + $0x10] sm:$0xf0]
      %v1651 = vrot.slane %v1645, 4
      %v1652 = vrot.slane %v1646, 4
      %v1653 = vrot.slane %v1647, 4
      %1654 = vrot.lane.b32.xlu0 %v1651, 95
      %v1655 = vpop.permute.xlu0 %1654
      %1656 = vrot.lane.b32.xlu0 %v1652, 95
      %v1657 = vpop.permute.xlu0 %1656
      %1658 = vrot.lane.b32.xlu0 %v1653, 95
      %v1659 = vpop.permute.xlu0 %1658
      %v1660 = vsel %vm524, %v1655, %v1657
      %v1661 = vsel %vm524, %v1657, %v1659
      %1664 = vst [vmem:[#allocation5 + $0x40] sm:$0xf] %v1660
      %1665 = vst [vmem:[#allocation5 + $0x48] sm:$0xf] %v1661
      %v1666 = vld [vmem:[%s4] sm:$0xf]
      %v1667 = vld [vmem:[#allocation5] sm:$0xff]
      %v1668 = vld [vmem:[#allocation5 + $0x8] sm:$0xff]
      %v1669 = vld [vmem:[#allocation5 + $0x10] sm:$0xff]
      %v1670 = vld [vmem:[#allocation5 + $0x18] sm:$0xff]
      %v1671 = vld [vmem:[#allocation5 + $0x20] sm:$0xff]
      %v1672 = vld [vmem:[#allocation5 + $0x28] sm:$0xff]
      %v1673 = vld [vmem:[#allocation5 + $0x30] sm:$0xff]
      %v1674 = vld [vmem:[#allocation5 + $0x38] sm:$0xff]
      %v1675 = vld [vmem:[#allocation5 + $0x40] sm:$0xf]
      %v1676 = vld [vmem:[#allocation5 + $0x48] sm:$0xf]
      %v1677 = vld [vmem:[%s5] sm:$0xf]
      %1679 = vset.pattern.permute.xlu0 0
      %1680 = vperm.xlu0 %1679, %v1677
      %v1681 = vpop.permute.xlu0 %1680
      %v1684 = vsel %vm594, %v1666, 0
      %v1687 = vsel %vm607, %v1675, 0
      %v1690 = vsel %vm607, %v1676, 0
      %1692 = vmatpush.msra.mxu0 0.0
      %1693 = vmatpush.msra.mxu0 0.0
      %1694 = vmatpush.msra.mxu0 0.0
      %1695 = vmatpush.msra.mxu0 0.0
      %1696 = vmatpush.msra.mxu0 0.0
      %1697 = vmatpush.msra.mxu0 0.0
      %1698 = vmatpush.msra.mxu0 0.0
      %1699 = vmatpush.msra.mxu0 0.0
      %1700 = vmatpush.msra.mxu0 0.0
      %1701 = vmatpush.msra.mxu0 0.0
      %1702 = vmatpush.msra.mxu0 0.0
      %1703 = vmatpush.msra.mxu0 %v1687
      %1704 = vmatpush.msra.mxu0 %v1673
      %1705 = vmatpush.msra.mxu0 %v1671
      %1706 = vmatpush.msra.mxu0 %v1669
      %1707 = vmatpush.msra.mxu0 %v1667
      %1708 = vmatmul.f32.gmra.mxu0 %v1684
      %v1709 = vpop.f32.mrf.mxu0
      %v1710 = vadd.f32 %v1681, %v1709
      %1711 = vdwg.mxu0
      %1712 = vmatpush.msra.mxu0 0.0
      %1713 = vmatpush.msra.mxu0 0.0
      %1714 = vmatpush.msra.mxu0 0.0
      %1715 = vmatpush.msra.mxu0 0.0
      %1716 = vmatpush.msra.mxu0 0.0
      %1717 = vmatpush.msra.mxu0 0.0
      %1718 = vmatpush.msra.mxu0 0.0
      %1719 = vmatpush.msra.mxu0 0.0
      %1720 = vmatpush.msra.mxu0 0.0
      %1721 = vmatpush.msra.mxu0 0.0
      %1722 = vmatpush.msra.mxu0 0.0
      %1723 = vmatpush.msra.mxu0 %v1690
      %1724 = vmatpush.msra.mxu0 %v1674
      %1725 = vmatpush.msra.mxu0 %v1672
      %1726 = vmatpush.msra.mxu0 %v1670
      %1727 = vmatpush.msra.mxu0 %v1668
      %1728 = vmatmul.f32.gmra.mxu0 %v1684
      %v1729 = vpop.f32.mrf.mxu0
      %v1730 = vadd.f32 %v1681, %v1729
      %1731 = vdwg.mxu0
      %v1732 = vld [vmem:[%s6] sm:$0xf]
      %v1733 = vmul.f32 %v1710, %v1710
      %v1734 = vmul.f32 %v1730, %v1730
      %v1735 = vld [vmem:[%s7] sm:$0xf]
      %1737 = vset.pattern.permute.xlu0 0
      %1738 = vperm.xlu0 %1737, %v1735
      %v1739 = vpop.permute.xlu0 %1738
      %v1742 = vsel %vm1009, %v1732, 0
      %v1745 = vsel %vm607, %v1733, 0
      %v1748 = vsel %vm607, %v1734, 0
      %1750 = vmatpush.msra.mxu0 0.0
      %1751 = vmatpush.msra.mxu0 0.0
      %1752 = vmatpush.msra.mxu0 0.0
      %1753 = vmatpush.msra.mxu0 0.0
      %1754 = vmatpush.msra.mxu0 0.0
      %1755 = vmatpush.msra.mxu0 0.0
      %1756 = vmatpush.msra.mxu0 0.0
      %1757 = vmatpush.msra.mxu0 0.0
      %1758 = vmatpush.msra.mxu0 0.0
      %1759 = vmatpush.msra.mxu0 0.0
      %1760 = vmatpush.msra.mxu0 0.0
      %1761 = vmatpush.msra.mxu0 0.0
      %1762 = vmatpush.msra.mxu0 0.0
      %1763 = vmatpush.msra.mxu0 0.0
      %1764 = vmatpush.msra.mxu0 0.0
      %1765 = vmatpush.msra.mxu0 %v1745
      %1766 = vmatmul.f32.gmra.mxu0 %v1742
      %v1767 = vpop.f32.mrf.mxu0
      %v1768 = vadd.f32 %v1739, %v1767
      %1769 = vdwg.mxu0
      %1770 = vmatpush.msra.mxu0 0.0
      %1771 = vmatpush.msra.mxu0 0.0
      %1772 = vmatpush.msra.mxu0 0.0
      %1773 = vmatpush.msra.mxu0 0.0
      %1774 = vmatpush.msra.mxu0 0.0
      %1775 = vmatpush.msra.mxu0 0.0
      %1776 = vmatpush.msra.mxu0 0.0
      %1777 = vmatpush.msra.mxu0 0.0
      %1778 = vmatpush.msra.mxu0 0.0
      %1779 = vmatpush.msra.mxu0 0.0
      %1780 = vmatpush.msra.mxu0 0.0
      %1781 = vmatpush.msra.mxu0 0.0
      %1782 = vmatpush.msra.mxu0 0.0
      %1783 = vmatpush.msra.mxu0 0.0
      %1784 = vmatpush.msra.mxu0 0.0
      %1785 = vmatpush.msra.mxu0 %v1748
      %1786 = vmatmul.f32.gmra.mxu0 %v1742
      %v1787 = vpop.f32.mrf.mxu0
      %v1788 = vadd.f32 %v1739, %v1787
      %1789 = vdwg.mxu0
      %v1790 = vmax.f32 %v1768, 0.0
      %v1791 = vmax.f32 %v1788, 0.0
      %v1792 = vld [vmem:[#allocation4 + $0x48] sm:$0xf]
      %v1793 = vld [vmem:[#allocation4 + $0x50] sm:$0xf]
      %v1794 = vld [vmem:[#allocation4 + $0x58] sm:$0xf]
      %v1795 = vrsqrt.pop %v1790
      %v1796 = vmul.f32 %v1795, %v1790
      %v1797 = vmul.f32 %v1796, %v1795
      %v1798 = vmul.f32 0.5, %v1797
      %v1799 = vsub.f32 1.5, %v1798
      %v1800 = vmul.f32 %v1795, %v1799
      %v1801 = vmul.f32 %v1790, %v1800
      %vm1802 = vcmp.eq.f32.partialorder %v1790, inf
      %v1803 = vsel %vm1802, %v1790, %v1801
      %vm1804 = vcmp.eq.f32.partialorder %v1790, 0.0
      %v1805 = vand.u32 %v1790, 2147483648
      %v1806 = vsel %vm1804, %v1805, %v1803
      %v1807 = vrsqrt.pop %v1791
      %v1808 = vmul.f32 %v1807, %v1791
      %v1809 = vmul.f32 %v1808, %v1807
      %v1810 = vmul.f32 0.5, %v1809
      %v1811 = vsub.f32 1.5, %v1810
      %v1812 = vmul.f32 %v1807, %v1811
      %v1813 = vmul.f32 %v1791, %v1812
      %vm1814 = vcmp.eq.f32.partialorder %v1791, inf
      %v1815 = vsel %vm1814, %v1791, %v1813
      %vm1816 = vcmp.eq.f32.partialorder %v1791, 0.0
      %v1817 = vand.u32 %v1791, 2147483648
      %v1818 = vsel %vm1816, %v1817, %v1815
      %v1819 = vmul.f32 %v1710, %v1806
      %v1820 = vmul.f32 %v1730, %v1818
      %1824 = vrot.lane.b32.xlu0 %v1792, 111
      %v1825 = vpop.permute.xlu0 %1824
      %1826 = vrot.lane.b32.xlu0 %v1793, 111
      %v1827 = vpop.permute.xlu0 %1826
      %1828 = vrot.lane.b32.xlu0 %v1794, 111
      %v1829 = vpop.permute.xlu0 %1828
      %v1830 = vsel %vm444, %v1825, %v1827
      %v1831 = vsel %vm444, %v1827, %v1829
      %v1834 = vadd.f32 %v1819, %v1830
      %v1835 = vadd.f32 %v1820, %v1831
      %v1838 = vrot.slane %v1835, 4
      %v1839 = vsel %vm607, %v1834, %v1838
      %s1841 = scalar_lea.vmem %s305, 16
      %1842 = vst [vmem:[%s1841] sm:$0xff] %v1839
      %v1843 = vld [vmem:[#allocation4] sm:$0xf]
      %v1844 = vld [vmem:[#allocation4 + $0x8] sm:$0xf]
      %v1845 = vld [vmem:[#allocation4 + $0x10] sm:$0xf]
      %1849 = vrot.lane.b32.xlu0 %v1843, 111
      %v1850 = vpop.permute.xlu0 %1849
      %1851 = vrot.lane.b32.xlu0 %v1844, 111
      %v1852 = vpop.permute.xlu0 %1851
      %1853 = vrot.lane.b32.xlu0 %v1845, 111
      %v1854 = vpop.permute.xlu0 %1853
      %v1855 = vsel %vm444, %v1850, %v1852
      %v1856 = vsel %vm444, %v1852, %v1854
      %1859 = vst [vmem:[#allocation5] sm:$0xf] %v1855
      %1860 = vst [vmem:[#allocation5 + $0x8] sm:$0xf] %v1856
      %v1861 = vld [vmem:[#allocation4] sm:$0xf0]
      %v1862 = vld [vmem:[#allocation4 + $0x8] sm:$0xf0]
      %v1863 = vld [vmem:[#allocation4 + $0x10] sm:$0xf0]
      %1867 = vrot.lane.b32.xlu0 %v1861, 111
      %v1868 = vpop.permute.xlu0 %1867
      %1869 = vrot.lane.b32.xlu0 %v1862, 111
      %v1870 = vpop.permute.xlu0 %1869
      %1871 = vrot.lane.b32.xlu0 %v1863, 111
      %v1872 = vpop.permute.xlu0 %1871
      %v1873 = vsel %vm444, %v1868, %v1870
      %v1874 = vsel %vm444, %v1870, %v1872
      %1877 = vst [vmem:[#allocation5] sm:$0xf0] %v1873
      %1878 = vst [vmem:[#allocation5 + $0x8] sm:$0xf0] %v1874
      %v1879 = vld [vmem:[#allocation4] sm:$0xf]
      %v1880 = vld [vmem:[#allocation4 + $0x8] sm:$0xf]
      %v1881 = vld [vmem:[#allocation4 + $0x10] sm:$0xf]
      %1885 = vrot.lane.b32.xlu0 %v1879, 110
      %v1886 = vpop.permute.xlu0 %1885
      %1887 = vrot.lane.b32.xlu0 %v1880, 110
      %v1888 = vpop.permute.xlu0 %1887
      %1889 = vrot.lane.b32.xlu0 %v1881, 110
      %v1890 = vpop.permute.xlu0 %1889
      %v1891 = vsel %vm467, %v1886, %v1888
      %v1892 = vsel %vm467, %v1888, %v1890
      %v1895 = vsel %vm372, %v1891, 0.0
      %v1896 = vsel %vm373, %v1892, 0.0
      %1897 = vst [vmem:[#allocation5 + $0x10] sm:$0xf] %v1895
      %1898 = vst [vmem:[#allocation5 + $0x18] sm:$0xf] %v1896
      %v1899 = vld [vmem:[#allocation4 + $0x18] sm:$0xf]
      %v1900 = vld [vmem:[#allocation4 + $0x20] sm:$0xf]
      %v1901 = vld [vmem:[#allocation4 + $0x28] sm:$0xf]
      %v1905 = vrot.slane %v1899, 4
      %v1906 = vrot.slane %v1900, 4
      %v1907 = vrot.slane %v1901, 4
      %1908 = vrot.lane.b32.xlu0 %v1905, 111
      %v1909 = vpop.permute.xlu0 %1908
      %1910 = vrot.lane.b32.xlu0 %v1906, 111
      %v1911 = vpop.permute.xlu0 %1910
      %1912 = vrot.lane.b32.xlu0 %v1907, 111
      %v1913 = vpop.permute.xlu0 %1912
      %v1914 = vsel %vm444, %v1909, %v1911
      %v1915 = vsel %vm444, %v1911, %v1913
      %1918 = vst [vmem:[#allocation5 + $0x10] sm:$0xf0] %v1914
      %1919 = vst [vmem:[#allocation5 + $0x18] sm:$0xf0] %v1915
      %v1920 = vld [vmem:[#allocation4 + $0x18] sm:$0xf0]
      %v1921 = vld [vmem:[#allocation4 + $0x20] sm:$0xf0]
      %v1922 = vld [vmem:[#allocation4 + $0x28] sm:$0xf0]
      %v1926 = vrot.slane %v1920, 4
      %v1927 = vrot.slane %v1921, 4
      %v1928 = vrot.slane %v1922, 4
      %1929 = vrot.lane.b32.xlu0 %v1926, 111
      %v1930 = vpop.permute.xlu0 %1929
      %1931 = vrot.lane.b32.xlu0 %v1927, 111
      %v1932 = vpop.permute.xlu0 %1931
      %1933 = vrot.lane.b32.xlu0 %v1928, 111
      %v1934 = vpop.permute.xlu0 %1933
      %v1935 = vsel %vm444, %v1930, %v1932
      %v1936 = vsel %vm444, %v1932, %v1934
      %1939 = vst [vmem:[#allocation5 + $0x20] sm:$0xf] %v1935
      %1940 = vst [vmem:[#allocation5 + $0x28] sm:$0xf] %v1936
      %v1941 = vld [vmem:[#allocation4 + $0x18] sm:$0xf]
      %v1942 = vld [vmem:[#allocation4 + $0x20] sm:$0xf]
      %v1943 = vld [vmem:[#allocation4 + $0x28] sm:$0xf]
      %1947 = vrot.lane.b32.xlu0 %v1941, 110
      %v1948 = vpop.permute.xlu0 %1947
      %1949 = vrot.lane.b32.xlu0 %v1942, 110
      %v1950 = vpop.permute.xlu0 %1949
      %1951 = vrot.lane.b32.xlu0 %v1943, 110
      %v1952 = vpop.permute.xlu0 %1951
      %v1953 = vsel %vm467, %v1948, %v1950
      %v1954 = vsel %vm467, %v1950, %v1952
      %v1957 = vsel %vm372, %v1953, 0.0
      %v1958 = vsel %vm373, %v1954, 0.0
      %v1961 = vrot.slane %v1957, 4
      %v1962 = vrot.slane %v1958, 4
      %1965 = vst [vmem:[#allocation5 + $0x20] sm:$0xf0] %v1961
      %1966 = vst [vmem:[#allocation5 + $0x28] sm:$0xf0] %v1962
      %v1967 = vld [vmem:[#allocation4] sm:$0xf]
      %v1968 = vld [vmem:[#allocation4 + $0x8] sm:$0xf]
      %v1969 = vld [vmem:[#allocation4 + $0x10] sm:$0xf]
      %1973 = vrot.lane.b32.xlu0 %v1967, 95
      %v1974 = vpop.permute.xlu0 %1973
      %1975 = vrot.lane.b32.xlu0 %v1968, 95
      %v1976 = vpop.permute.xlu0 %1975
      %1977 = vrot.lane.b32.xlu0 %v1969, 95
      %v1978 = vpop.permute.xlu0 %1977
      %v1979 = vsel %vm524, %v1974, %v1976
      %v1980 = vsel %vm524, %v1976, %v1978
      %1983 = vst [vmem:[#allocation5 + $0x30] sm:$0xf] %v1979
      %1984 = vst [vmem:[#allocation5 + $0x38] sm:$0xf] %v1980
      %v1985 = vld [vmem:[#allocation4] sm:$0xf0]
      %v1986 = vld [vmem:[#allocation4 + $0x8] sm:$0xf0]
      %v1987 = vld [vmem:[#allocation4 + $0x10] sm:$0xf0]
      %1991 = vrot.lane.b32.xlu0 %v1985, 95
      %v1992 = vpop.permute.xlu0 %1991
      %1993 = vrot.lane.b32.xlu0 %v1986, 95
      %v1994 = vpop.permute.xlu0 %1993
      %1995 = vrot.lane.b32.xlu0 %v1987, 95
      %v1996 = vpop.permute.xlu0 %1995
      %v1997 = vsel %vm524, %v1992, %v1994
      %v1998 = vsel %vm524, %v1994, %v1996
      %2001 = vst [vmem:[#allocation5 + $0x30] sm:$0xf0] %v1997
      %2002 = vst [vmem:[#allocation5 + $0x38] sm:$0xf0] %v1998
      %v2003 = vld [vmem:[#allocation4] sm:$0xf]
      %v2004 = vld [vmem:[#allocation4 + $0x8] sm:$0xf]
      %v2005 = vld [vmem:[#allocation4 + $0x10] sm:$0xf]
      %2009 = vrot.lane.b32.xlu0 %v2003, 94
      %v2010 = vpop.permute.xlu0 %2009
      %2011 = vrot.lane.b32.xlu0 %v2004, 94
      %v2012 = vpop.permute.xlu0 %2011
      %2013 = vrot.lane.b32.xlu0 %v2005, 94
      %v2014 = vpop.permute.xlu0 %2013
      %v2015 = vsel %vm547, %v2010, %v2012
      %v2016 = vsel %vm547, %v2012, %v2014
      %v2019 = vsel %vm372, %v2015, 0.0
      %v2020 = vsel %vm373, %v2016, 0.0
      %2021 = vst [vmem:[#allocation5 + $0x40] sm:$0xf] %v2019
      %2022 = vst [vmem:[#allocation5 + $0x48] sm:$0xf] %v2020
      %v2023 = vld [vmem:[%s4] sm:$0xf]
      %v2024 = vld [vmem:[#allocation5] sm:$0xff]
      %v2025 = vld [vmem:[#allocation5 + $0x8] sm:$0xff]
      %v2026 = vld [vmem:[#allocation5 + $0x10] sm:$0xff]
      %v2027 = vld [vmem:[#allocation5 + $0x18] sm:$0xff]
      %v2028 = vld [vmem:[#allocation5 + $0x20] sm:$0xff]
      %v2029 = vld [vmem:[#allocation5 + $0x28] sm:$0xff]
      %v2030 = vld [vmem:[#allocation5 + $0x30] sm:$0xff]
      %v2031 = vld [vmem:[#allocation5 + $0x38] sm:$0xff]
      %v2032 = vld [vmem:[#allocation5 + $0x40] sm:$0xf]
      %v2033 = vld [vmem:[#allocation5 + $0x48] sm:$0xf]
      %v2034 = vld [vmem:[%s5] sm:$0xf]
      %2036 = vset.pattern.permute.xlu0 0
      %2037 = vperm.xlu0 %2036, %v2034
      %v2038 = vpop.permute.xlu0 %2037
      %v2041 = vsel %vm594, %v2023, 0
      %v2044 = vsel %vm607, %v2032, 0
      %v2047 = vsel %vm607, %v2033, 0
      %2049 = vmatpush.msra.mxu0 0.0
      %2050 = vmatpush.msra.mxu0 0.0
      %2051 = vmatpush.msra.mxu0 0.0
      %2052 = vmatpush.msra.mxu0 0.0
      %2053 = vmatpush.msra.mxu0 0.0
      %2054 = vmatpush.msra.mxu0 0.0
      %2055 = vmatpush.msra.mxu0 0.0
      %2056 = vmatpush.msra.mxu0 0.0
      %2057 = vmatpush.msra.mxu0 0.0
      %2058 = vmatpush.msra.mxu0 0.0
      %2059 = vmatpush.msra.mxu0 0.0
      %2060 = vmatpush.msra.mxu0 %v2044
      %2061 = vmatpush.msra.mxu0 %v2030
      %2062 = vmatpush.msra.mxu0 %v2028
      %2063 = vmatpush.msra.mxu0 %v2026
      %2064 = vmatpush.msra.mxu0 %v2024
      %2065 = vmatmul.f32.gmra.mxu0 %v2041
      %v2066 = vpop.f32.mrf.mxu0
      %v2067 = vadd.f32 %v2038, %v2066
      %2068 = vdwg.mxu0
      %2069 = vmatpush.msra.mxu0 0.0
      %2070 = vmatpush.msra.mxu0 0.0
      %2071 = vmatpush.msra.mxu0 0.0
      %2072 = vmatpush.msra.mxu0 0.0
      %2073 = vmatpush.msra.mxu0 0.0
      %2074 = vmatpush.msra.mxu0 0.0
      %2075 = vmatpush.msra.mxu0 0.0
      %2076 = vmatpush.msra.mxu0 0.0
      %2077 = vmatpush.msra.mxu0 0.0
      %2078 = vmatpush.msra.mxu0 0.0
      %2079 = vmatpush.msra.mxu0 0.0
      %2080 = vmatpush.msra.mxu0 %v2047
      %2081 = vmatpush.msra.mxu0 %v2031
      %2082 = vmatpush.msra.mxu0 %v2029
      %2083 = vmatpush.msra.mxu0 %v2027
      %2084 = vmatpush.msra.mxu0 %v2025
      %2085 = vmatmul.f32.gmra.mxu0 %v2041
      %v2086 = vpop.f32.mrf.mxu0
      %v2087 = vadd.f32 %v2038, %v2086
      %2088 = vdwg.mxu0
      %v2089 = vld [vmem:[%s6] sm:$0xf]
      %v2090 = vmul.f32 %v2067, %v2067
      %v2091 = vmul.f32 %v2087, %v2087
      %v2092 = vld [vmem:[%s7] sm:$0xf]
      %2094 = vset.pattern.permute.xlu0 0
      %2095 = vperm.xlu0 %2094, %v2092
      %v2096 = vpop.permute.xlu0 %2095
      %v2099 = vsel %vm1009, %v2089, 0
      %v2102 = vsel %vm607, %v2090, 0
      %v2105 = vsel %vm607, %v2091, 0
      %2107 = vmatpush.msra.mxu0 0.0
      %2108 = vmatpush.msra.mxu0 0.0
      %2109 = vmatpush.msra.mxu0 0.0
      %2110 = vmatpush.msra.mxu0 0.0
      %2111 = vmatpush.msra.mxu0 0.0
      %2112 = vmatpush.msra.mxu0 0.0
      %2113 = vmatpush.msra.mxu0 0.0
      %2114 = vmatpush.msra.mxu0 0.0
      %2115 = vmatpush.msra.mxu0 0.0
      %2116 = vmatpush.msra.mxu0 0.0
      %2117 = vmatpush.msra.mxu0 0.0
      %2118 = vmatpush.msra.mxu0 0.0
      %2119 = vmatpush.msra.mxu0 0.0
      %2120 = vmatpush.msra.mxu0 0.0
      %2121 = vmatpush.msra.mxu0 0.0
      %2122 = vmatpush.msra.mxu0 %v2102
      %2123 = vmatmul.f32.gmra.mxu0 %v2099
      %v2124 = vpop.f32.mrf.mxu0
      %v2125 = vadd.f32 %v2096, %v2124
      %2126 = vdwg.mxu0
      %2127 = vmatpush.msra.mxu0 0.0
      %2128 = vmatpush.msra.mxu0 0.0
      %2129 = vmatpush.msra.mxu0 0.0
      %2130 = vmatpush.msra.mxu0 0.0
      %2131 = vmatpush.msra.mxu0 0.0
      %2132 = vmatpush.msra.mxu0 0.0
      %2133 = vmatpush.msra.mxu0 0.0
      %2134 = vmatpush.msra.mxu0 0.0
      %2135 = vmatpush.msra.mxu0 0.0
      %2136 = vmatpush.msra.mxu0 0.0
      %2137 = vmatpush.msra.mxu0 0.0
      %2138 = vmatpush.msra.mxu0 0.0
      %2139 = vmatpush.msra.mxu0 0.0
      %2140 = vmatpush.msra.mxu0 0.0
      %2141 = vmatpush.msra.mxu0 0.0
      %2142 = vmatpush.msra.mxu0 %v2105
      %2143 = vmatmul.f32.gmra.mxu0 %v2099
      %v2144 = vpop.f32.mrf.mxu0
      %v2145 = vadd.f32 %v2096, %v2144
      %2146 = vdwg.mxu0
      %v2147 = vmax.f32 %v2125, 0.0
      %v2148 = vmax.f32 %v2145, 0.0
      %v2149 = vld [vmem:[#allocation4 + $0x48] sm:$0xf0]
      %v2150 = vld [vmem:[#allocation4 + $0x50] sm:$0xf0]
      %v2151 = vld [vmem:[#allocation4 + $0x58] sm:$0xf0]
      %v2152 = vrsqrt.pop %v2147
      %v2153 = vmul.f32 %v2152, %v2147
      %v2154 = vmul.f32 %v2153, %v2152
      %v2155 = vmul.f32 0.5, %v2154
      %v2156 = vsub.f32 1.5, %v2155
      %v2157 = vmul.f32 %v2152, %v2156
      %v2158 = vmul.f32 %v2147, %v2157
      %vm2159 = vcmp.eq.f32.partialorder %v2147, inf
      %v2160 = vsel %vm2159, %v2147, %v2158
      %vm2161 = vcmp.eq.f32.partialorder %v2147, 0.0
      %v2162 = vand.u32 %v2147, 2147483648
      %v2163 = vsel %vm2161, %v2162, %v2160
      %v2164 = vrsqrt.pop %v2148
      %v2165 = vmul.f32 %v2164, %v2148
      %v2166 = vmul.f32 %v2165, %v2164
      %v2167 = vmul.f32 0.5, %v2166
      %v2168 = vsub.f32 1.5, %v2167
      %v2169 = vmul.f32 %v2164, %v2168
      %v2170 = vmul.f32 %v2148, %v2169
      %vm2171 = vcmp.eq.f32.partialorder %v2148, inf
      %v2172 = vsel %vm2171, %v2148, %v2170
      %vm2173 = vcmp.eq.f32.partialorder %v2148, 0.0
      %v2174 = vand.u32 %v2148, 2147483648
      %v2175 = vsel %vm2173, %v2174, %v2172
      %v2176 = vmul.f32 %v2067, %v2163
      %v2177 = vmul.f32 %v2087, %v2175
      %v2181 = vrot.slane %v2149, 4
      %v2182 = vrot.slane %v2150, 4
      %v2183 = vrot.slane %v2151, 4
      %2184 = vrot.lane.b32.xlu0 %v2181, 111
      %v2185 = vpop.permute.xlu0 %2184
      %2186 = vrot.lane.b32.xlu0 %v2182, 111
      %v2187 = vpop.permute.xlu0 %2186
      %2188 = vrot.lane.b32.xlu0 %v2183, 111
      %v2189 = vpop.permute.xlu0 %2188
      %v2190 = vsel %vm444, %v2185, %v2187
      %v2191 = vsel %vm444, %v2187, %v2189
      %v2194 = vadd.f32 %v2176, %v2190
      %v2195 = vadd.f32 %v2177, %v2191
      %v2198 = vrot.slane %v2195, 4
      %v2199 = vsel %vm607, %v2194, %v2198
      %s2201 = scalar_lea.vmem %s305, 24
      %2202 = vst [vmem:[%s2201] sm:$0xff] %v2199
      %p2203 = scmp.lt.s32.totalorder %s19, 1
      %s2204 = scalar_select %p2203, %s19, 1
      %s2205 = smul.addr %s2204, 8
      %s2206 = smul.addr %s2205, 4
      %s2207 = scalar_lea.vmem %s8, %s2206
      // Predicated region
      $region53: #{_lambda_.1} parent=51 // pred_check
        %p2208 = pneg %p210
      $region54: #{_lambda_.1} parent=51 // pred_check_branch
        %2210 = sbr.rel (%p2208) target = $region56
      $region55: #{_lambda_.1} parent=51 // pred_region
        _
      $region56: #{_lambda_.1} parent=51 // pred_fallthru
        _
    $region52: #{_lambda_.1} parent=5 // pred_fallthru
      _
    %p2211 = scmp.le.s32.totalorder 2, %s14
    // Predicated region
    $region57: #{_lambda_.1} parent=5 // pred_check
      %p2212 = pneg %p2211
    $region58: #{_lambda_.1} parent=5 // pred_check_branch
      %2214 = sbr.rel (%p2212) target = $region60
    $region59: #{_lambda_.1} parent=5 // pred_region
      %s2215 = ssub.s32 %s14, 2
      // Predicated region
      $region61: #{_lambda_.1} parent=59 // pred_check
        %p2216 = pneg %p216
      $region62: #{_lambda_.1} parent=59 // pred_check_branch
        %2218 = sbr.rel (%p2216) target = $region64
      $region63: #{_lambda_.1} parent=59 // pred_region
        %p2219 = scmp.lt.s32.totalorder %s20, 1
        %s2220 = scalar_select %p2219, %s20, 1
        %s2221 = smul.addr %s2220, 8
        %s2222 = smul.addr %s2221, 4
        %s2223 = scalar_lea.vmem %s8, %s2222
      $region64: #{_lambda_.1} parent=59 // pred_fallthru
        _
    $region60: #{_lambda_.1} parent=5 // pred_fallthru
      _
  $region6: #{_lambda_.1} parent=0 // loop_footer
    %s18 = sadd.s32 1, %s14
  $region7: #{_lambda_.1} parent=0 // loop_footer_branch
    %13 = sbr.rel target = $region3
  $region8: #{_lambda_.1} parent=0 // loop_exit
    _

</llo_original>
